<compile_context>
chip_gen: v6e
topology: v6e:2x2x1
jax: 0.10.0
libtpu: 0.0.40
codegen_flags: <defaults>
</compile_context>

<pallas_src>
import jax
import jax.numpy as jnp
from jax import lax
from jax.experimental import pallas as pl
from jax.experimental.pallas import tpu as pltpu
import numpy as np


# --------------------------------------------------------------------------
# Pallas kernel: one grid step = NB batch elements, fully fused in VMEM.
# --------------------------------------------------------------------------
def up_double_conv_kernel(x2_ref, x1_ref, ahf_ref, q2_ref, q1_ref, b1_ref,
                          q3_ref, b2_ref, o_ref, pad2_ref, pad1_ref, padm_ref):
    """
    x2_ref : (NB, H, W*Ch)      bf16  lane-dense skip connection
    x1_ref : (NB, Hin, Win*Ch)  bf16  lane-dense low-res input
    ahf_ref: (H+2, Hin)         bf16  height interp (F.pad rows + conv halo baked in)
    q2_ref : (3, W*Ch,  W*C1)   bf16  conv1 row-tap matrices, x2 source (BN scale folded)
    q1_ref : (3, Win*Ch, W*C1)  bf16  conv1 row-tap matrices, upsampled source
                                      (width interp + F.pad cols + BN scale folded)
    b1_ref : (1, W*C1)          f32   conv1 folded bias, tiled per x
    q3_ref : (3, W*C1, W*C2)    bf16  conv2 row-tap matrices (BN scale folded)
    b2_ref : (1, W*C2)          f32   conv2 folded bias, tiled per x
    o_ref  : (NB, H, W*C2)      f32   lane-dense output block
    pad2_ref / pad1_ref / padm_ref : VMEM scratches (NB, H+2, lanes), bf16
    """
    NB, H, WCh = x2_ref.shape
    WinCh = x1_ref.shape[2]
    WC1 = q2_ref.shape[2]
    WC2 = q3_ref.shape[2]
    f32 = jnp.float32

    # Halo rows only (interiors are fully overwritten below).  Written every
    # step because the grid axis is "parallel" (per-core scratch on multi-TC
    # chips may never execute program_id == 0).  Cost: four 1-row stores.
    zrow2 = jnp.zeros((NB, 1, WCh), pad2_ref.dtype)
    zrowm = jnp.zeros((NB, 1, WC1), padm_ref.dtype)
    pad2_ref[:, 0:1, :] = zrow2
    pad2_ref[:, H + 1:H + 2, :] = zrow2
    padm_ref[:, 0:1, :] = zrowm
    padm_ref[:, H + 1:H + 2, :] = zrowm

    # Skip connection straight into the interior rows (lane-dense store).
    pad2_ref[:, 1:H + 1, :] = x2_ref[...]

    # Upsample: only the height interpolation happens here (one small bf16
    # matmul per batch element); width interpolation is folded into q1.
    # ahf already contains the F.pad zero rows and the conv halo zero rows,
    # so all H+2 rows of pad1 are (re)written — no zero-init needed.
    for nb in range(NB):
        r = jnp.dot(ahf_ref[...], x1_ref[nb], preferred_element_type=f32)
        pad1_ref[nb, :, :] = r.astype(pad1_ref.dtype)          # (H+2, Win*Ch)

    # conv1 (+ folded BN scale): three row-tap matmuls per source.  The 3x3
    # windows are consumed directly as lane-dense slabs of the scratches —
    # no im2col patch, no concatenate, no channel interleave.
    acc1 = jnp.zeros((NB * H, WC1), f32)
    for dy in range(3):
        s2 = pad2_ref[:, dy:dy + H, :].reshape(NB * H, WCh)
        s1 = pad1_ref[:, dy:dy + H, :].reshape(NB * H, WinCh)
        acc1 = acc1 + jnp.dot(s2, q2_ref[dy], preferred_element_type=f32)
        acc1 = acc1 + jnp.dot(s1, q1_ref[dy], preferred_element_type=f32)
    y1 = jnp.maximum(acc1 + b1_ref[...], 0.0)                  # bias + ReLU
    padm_ref[:, 1:H + 1, :] = y1.reshape(NB, H, WC1).astype(padm_ref.dtype)

    # conv2 (+ folded BN scale), lane-dense output store.
    acc2 = jnp.zeros((NB * H, WC2), f32)
    for dy in range(3):
        sm = padm_ref[:, dy:dy + H, :].reshape(NB * H, WC1)
        acc2 = acc2 + jnp.dot(sm, q3_ref[dy], preferred_element_type=f32)
    y2 = jnp.maximum(acc2 + b2_ref[...], 0.0)
    o_ref[...] = y2.reshape(NB, H, WC2).astype(o_ref.dtype)


# --------------------------------------------------------------------------
# Host-side constant folding helpers (numpy, run once per shape/params).
# --------------------------------------------------------------------------
def _interp_matrix(n_in, n_out):
    """align_corners=True linear interpolation matrix of shape (n_out, n_in)."""
    A = np.zeros((n_out, n_in), np.float32)
    if n_in == 1 or n_out == 1:
        src = np.zeros((n_out,), np.float64)
    else:
        src = np.arange(n_out, dtype=np.float64) * (n_in - 1) / (n_out - 1)
    i0 = np.minimum(np.floor(src).astype(np.int64), n_in - 1)
    i1 = np.minimum(i0 + 1, n_in - 1)
    frac = (src - i0).astype(np.float32)
    for r in range(n_out):
        A[r, i0[r]] += 1.0 - frac[r]
        A[r, i1[r]] += frac[r]
    return A


def _pad_or_crop_rows(A, target, pad_before):
    """F.pad-style zero-pad (or crop if negative) applied to the output rows."""
    n = A.shape[0]
    out = np.zeros((target, A.shape[1]), np.float32)
    src0 = max(0, -pad_before)
    dst0 = max(0, pad_before)
    count = min(n - src0, target - dst0)
    if count > 0:
        out[dst0:dst0 + count] = A[src0:src0 + count]
    return out


def _conv_row_tap_matrices(w_hwio, w_out, width_map=None):
    """Banded 'implicit im2col' matrices for a 3x3 SAME conv on lane-dense rows.

    Returns q of shape (3, K, w_out*cout) with
      q[dy, wi*cin + c, x*cout + co] = sum_{dx : 0 <= x+dx-1 < w_out}
            width_map[x+dx-1, wi] * w_hwio[dy, dx, c, co]
    width_map defaults to the identity (source already at output width); for
    the upsampled source it is the (F.pad-baked) width interpolation matrix,
    which composes the bilinear width upsample into the conv weights.
    """
    kh, kw, cin, cout = w_hwio.shape
    assert (kh, kw) == (3, 3)
    if width_map is None:
        width_map = np.eye(w_out, dtype=np.float32)
    w_in = width_map.shape[1]
    q = np.zeros((3, w_in * cin, w_out * cout), np.float32)
    for dy in range(3):
        for x in range(w_out):
            for dx in range(3):
                xi = x + dx - 1
                if 0 <= xi < w_out:
                    blk = np.einsum('w,cf->wcf', width_map[xi],
                                    w_hwio[dy, dx]).reshape(w_in * cin, cout)
                    q[dy, :, x * cout:(x + 1) * cout] += blk
    return q


def make_params(key, in_ch, out_ch):
    """Deterministic synthetic parameters for one (conv, BN) pair."""
    k = jax.random.split(key, 6)
    fan_in = in_ch * 9
    bound = 1.0 / np.sqrt(fan_in)
    # PyTorch conv weight is (out_ch, in_ch, kh, kw) -> convert to HWIO.
    w_oihw = jax.random.uniform(k[0], (out_ch, in_ch, 3, 3),
                                jnp.float32, -bound, bound)
    w_hwio = jnp.transpose(w_oihw, (2, 3, 1, 0))
    conv_b = jax.random.uniform(k[1], (out_ch,), jnp.float32, -bound, bound)
    gamma = jax.random.uniform(k[2], (out_ch,), jnp.float32, 0.5, 1.5)
    beta = jax.random.uniform(k[3], (out_ch,), jnp.float32, -0.5, 0.5)
    r_mean = jax.random.uniform(k[4], (out_ch,), jnp.float32, -0.5, 0.5)
    r_var = jax.random.uniform(k[5], (out_ch,), jnp.float32, 0.5, 1.5)
    return w_hwio, conv_b, gamma, beta, r_mean, r_var


# --------------------------------------------------------------------------
# Public wrapper: PyTorch-equivalent up.forward(x1, x2), NCHW in / NCHW out.
# --------------------------------------------------------------------------
def up_forward_pallas(x1_nchw, x2_nchw, params1, params2, *,
                      grid_splits=None, eps=1e-5):
    N, Ch, Hin, Win = x1_nchw.shape
    N2, Ch2, H, W = x2_nchw.shape
    assert N2 == N and Ch2 == Ch, "x1/x2 must share batch and channel count"

    (w1, b1, g1, bt1, mu1, var1) = params1
    (w2, b2, g2, bt2, mu2, var2) = params2
    Cin = 2 * Ch
    C1 = w1.shape[-1]
    C2 = w2.shape[-1]
    assert w1.shape == (3, 3, Cin, C1) and w2.shape == (3, 3, C1, C2)

    if grid_splits is None:
        # 2 keeps both v7x TensorCores busy; use 1 on single-TC v5e/v6e to
        # fold the whole batch into the matmul M dimension of one step.
        grid_splits = 2 if (N % 2 == 0 and N >= 2) else 1
    G = grid_splits
    assert N % G == 0, "grid_splits must divide the batch"
    NB = N // G

    # ---- lane-dense bf16 inputs (channels folded into the lane axis) ----
    # TODO(synk): if the surrounding model keeps activations in NHWC /
    # lane-dense form, these transposes (and the output one) disappear.
    x1l = jnp.transpose(x1_nchw, (0, 2, 3, 1)).reshape(N, Hin, Win * Ch)
    x2l = jnp.transpose(x2_nchw, (0, 2, 3, 1)).reshape(N, H, W * Ch)
    x1l = x1l.astype(jnp.bfloat16)
    x2l = x2l.astype(jnp.bfloat16)

    # ---- host-side constant folding ----
    # Height interpolation (align_corners=True) + F.pad rows + conv halo rows.
    a_h = _pad_or_crop_rows(_interp_matrix(Hin, 2 * Hin), H, (H - 2 * Hin) // 2)
    ahf = np.zeros((H + 2, Hin), np.float32)
    ahf[1:H + 1] = a_h
    # Width interpolation + F.pad columns (composed into conv1's weights).
    a_w = _pad_or_crop_rows(_interp_matrix(Win, 2 * Win), W, (W - 2 * Win) // 2)

    # Fold BN (inference stats) scale into the conv weights, shift into a bias.
    s1 = np.asarray(g1) / np.sqrt(np.asarray(var1) + eps)
    s2 = np.asarray(g2) / np.sqrt(np.asarray(var2) + eps)
    w1s = np.asarray(w1, np.float32) * s1                      # (3,3,Cin,C1)
    w2s = np.asarray(w2, np.float32) * s2                      # (3,3,C1,C2)
    bias1 = (np.asarray(b1) - np.asarray(mu1)) * s1 + np.asarray(bt1)
    bias2 = (np.asarray(b2) - np.asarray(mu2)) * s2 + np.asarray(bt2)

    # Banded row-tap matrices.  conv1 is split by source (x2 = channels
    # 0..Ch-1, upsampled x1 = channels Ch..2Ch-1), so the kernel never has to
    # concatenate channels; the width interpolation is composed into the
    # upsampled-source matrices.
    q2 = _conv_row_tap_matrices(w1s[:, :, :Ch, :], W)                  # x2
    q1 = _conv_row_tap_matrices(w1s[:, :, Ch:, :], W, width_map=a_w)   # x1-up
    q3 = _conv_row_tap_matrices(w2s, W)

    ahf_j = jnp.asarray(ahf, jnp.bfloat16)
    q2_j = jnp.asarray(q2, jnp.bfloat16)
    q1_j = jnp.asarray(q1, jnp.bfloat16)
    q3_j = jnp.asarray(q3, jnp.bfloat16)
    b1_j = jnp.asarray(np.tile(bias1, W)[None, :], jnp.float32)    # (1, W*C1)
    b2_j = jnp.asarray(np.tile(bias2, W)[None, :], jnp.float32)    # (1, W*C2)

    flops = N * (2 * (H + 2) * Hin * (Win * Ch)
                 + 3 * 2 * H * (W * Ch) * (W * C1)
                 + 3 * 2 * H * (Win * Ch) * (W * C1)
                 + 3 * 2 * H * (W * C1) * (W * C2))
    bytes_accessed = (2 * (int(x1l.size) + int(x2l.size))
                      + 2 * (int(ahf_j.size) + int(q1_j.size)
                             + int(q2_j.size) + int(q3_j.size))
                      + 4 * (int(b1_j.size) + int(b2_j.size))
                      + 4 * N * H * W * C2)

    out = pl.pallas_call(
        up_double_conv_kernel,
        out_shape=jax.ShapeDtypeStruct((N, H, W * C2), jnp.float32),
        grid_spec=pltpu.PrefetchScalarGridSpec(
            num_scalar_prefetch=0,
            grid=(G,),
            in_specs=[
                pl.BlockSpec((NB, H, W * Ch), lambda g: (g, 0, 0)),
                pl.BlockSpec((NB, Hin, Win * Ch), lambda g: (g, 0, 0)),
                pl.BlockSpec((H + 2, Hin), lambda g: (0, 0)),
                pl.BlockSpec((3, W * Ch, W * C1), lambda g: (0, 0, 0)),
                pl.BlockSpec((3, Win * Ch, W * C1), lambda g: (0, 0, 0)),
                pl.BlockSpec((1, W * C1), lambda g: (0, 0)),
                pl.BlockSpec((3, W * C1, W * C2), lambda g: (0, 0, 0)),
                pl.BlockSpec((1, W * C2), lambda g: (0, 0)),
            ],
            out_specs=pl.BlockSpec((NB, H, W * C2), lambda g: (g, 0, 0)),
            scratch_shapes=[
                pltpu.VMEM((NB, H + 2, W * Ch), jnp.bfloat16),     # pad2
                pltpu.VMEM((NB, H + 2, Win * Ch), jnp.bfloat16),   # pad1
                pltpu.VMEM((NB, H + 2, W * C1), jnp.bfloat16),     # padm
            ]),
        compiler_params=pltpu.CompilerParams(
            dimension_semantics=("parallel",)),
        cost_estimate=pl.CostEstimate(flops=flops, transcendentals=0,
                                      bytes_accessed=bytes_accessed),
    )(x2l, x1l, ahf_j, q2_j, q1_j, b1_j, q3_j, b2_j)

    # Lane-dense (N, H, W*C2) -> (N, C2, H, W) to match the torch layout.
    out = out.reshape(N, H, W, C2)
    return jnp.transpose(out, (0, 3, 1, 2))


# --------------------------------------------------------------------------
# Pure-JAX reference (independent code path) for verification.
# --------------------------------------------------------------------------
def up_forward_reference(x1_nchw, x2_nchw, params1, params2, eps=1e-5):
    x1 = jnp.transpose(x1_nchw, (0, 2, 3, 1))
    x2 = jnp.transpose(x2_nchw, (0, 2, 3, 1))
    _, Hin, Win, _ = x1.shape
    _, H, W, _ = x2.shape

    def up_axis(x, axis, n_out):
        n_in = x.shape[axis]
        if n_in == 1 or n_out == 1:
            src = np.zeros((n_out,), np.float64)
        else:
            src = np.arange(n_out, dtype=np.float64) * (n_in - 1) / (n_out - 1)
        i0 = np.minimum(np.floor(src).astype(np.int32), n_in - 1)
        i1 = np.minimum(i0 + 1, n_in - 1)
        frac = jnp.asarray(src - i0, jnp.float32)
        shape = [1] * x.ndim
        shape[axis] = n_out
        frac = frac.reshape(shape)
        return (jnp.take(x, i0, axis=axis) * (1.0 - frac)
                + jnp.take(x, i1, axis=axis) * frac)

    x1u = up_axis(up_axis(x1, 1, 2 * Hin), 2, 2 * Win)

    diffY, diffX = H - x1u.shape[1], W - x1u.shape[2]
    pad_cfg = [(0, 0, 0),
               (diffY // 2, diffY - diffY // 2, 0),
               (diffX // 2, diffX - diffX // 2, 0),
               (0, 0, 0)]
    x1u = lax.pad(x1u, jnp.array(0.0, dtype=x1u.dtype), pad_cfg)

    x = jnp.concatenate([x2, x1u], axis=-1)
    for (w, b, g, bt, mu, var) in (params1, params2):
        y = lax.conv_general_dilated(
            x, w, window_strides=(1, 1), padding="SAME",
            dimension_numbers=("NHWC", "HWIO", "NHWC")) + b
        y = g * (y - mu) / jnp.sqrt(var + eps) + bt
        x = jnp.maximum(y, 0.0)
    return jnp.transpose(x, (0, 3, 1, 2))


if __name__ == "__main__":
    def run_case(name, N, ch_half, out_ch, H, W, hin, win, grid_splits):
        root = jax.random.PRNGKey(0)
        k1, k2, kp1, kp2 = jax.random.split(root, 4)
        x1 = jax.random.normal(k1, (N, ch_half, hin, win), jnp.float32)
        x2 = jax.random.normal(k2, (N, ch_half, H, W), jnp.float32)
        params1 = make_params(kp1, 2 * ch_half, out_ch)   # conv1: 2*ch_half -> out_ch
        params2 = make_params(kp2, out_ch, out_ch)        # conv2: out_ch -> out_ch
        out = jax.block_until_ready(
            up_forward_pallas(x1, x2, params1, params2, grid_splits=grid_splits))
        ref = jax.block_until_ready(
            up_forward_reference(x1, x2, params1, params2))
        assert out.shape == (N, out_ch, H, W), (name, out.shape)
        # bf16 MXU inputs / bf16-resident intermediates (f32 accumulation):
        # tolerance is loose for rounding but far tighter than any structural
        # (tap / channel / layout / padding) error would produce.
        np.testing.assert_allclose(np.asarray(out), np.asarray(ref),
                                   rtol=5e-2, atol=8e-2, err_msg=name)

    # up(in_ch=8, out_ch=8, bilinear=True): x1 (2,4,8,8), x2 (2,4,16,16)
    run_case("even_2steps", N=2, ch_half=4, out_ch=8, H=16, W=16,
             hin=8, win=8, grid_splits=2)     # one batch element per TC (v7x)
    run_case("even_batchfold", N=2, ch_half=4, out_ch=8, H=16, W=16,
             hin=8, win=8, grid_splits=1)     # whole batch folded into M (v5e/v6e)
    run_case("odd_fpad", N=2, ch_half=4, out_ch=8, H=16, W=16,
             hin=5, win=5, grid_splits=2)     # exercises the F.pad zero rows/cols
    print("KERNEL_OK")
</pallas_src>

<mosaic_0001>
module attributes {stable_mosaic.version = 11 : i64} {
  func.func @up_double_conv_kernel(%arg0: i32, %arg1: memref<1x16x64xbf16, #tpu.memory_space<vmem>>, %arg2: memref<1x8x32xbf16, #tpu.memory_space<vmem>>, %arg3: memref<18x8xbf16, #tpu.memory_space<vmem>>, %arg4: memref<3x64x128xbf16, #tpu.memory_space<vmem>>, %arg5: memref<3x32x128xbf16, #tpu.memory_space<vmem>>, %arg6: memref<1x128xf32, #tpu.memory_space<vmem>>, %arg7: memref<3x128x128xbf16, #tpu.memory_space<vmem>>, %arg8: memref<1x128xf32, #tpu.memory_space<vmem>>, %arg9: memref<1x16x128xf32, #tpu.memory_space<vmem>>, %arg10: memref<1x18x64xbf16, #tpu.memory_space<vmem>>, %arg11: memref<1x18x32xbf16, #tpu.memory_space<vmem>>, %arg12: memref<1x18x128xbf16, #tpu.memory_space<vmem>>) attributes {dimension_semantics = [#tpu.dimension_semantics<parallel>], iteration_bounds = array<i64: 2>, scalar_prefetch = 0 : i64, scratch_operands = 3 : i64, tpu.core_type = #tpu.core_type<tc>, window_params = [{transform_indices = @transform_0, window_bounds = array<i64: 1, 16, 64>}, {transform_indices = @transform_1, window_bounds = array<i64: 1, 8, 32>}, {pipeline_mode = #tpu.pipeline_mode<synchronous>, transform_indices = @transform_2, window_bounds = array<i64: 18, 8>}, {pipeline_mode = #tpu.pipeline_mode<synchronous>, transform_indices = @transform_3, window_bounds = array<i64: 3, 64, 128>}, {pipeline_mode = #tpu.pipeline_mode<synchronous>, transform_indices = @transform_4, window_bounds = array<i64: 3, 32, 128>}, {pipeline_mode = #tpu.pipeline_mode<synchronous>, transform_indices = @transform_5, window_bounds = array<i64: 1, 128>}, {pipeline_mode = #tpu.pipeline_mode<synchronous>, transform_indices = @transform_6, window_bounds = array<i64: 3, 128, 128>}, {pipeline_mode = #tpu.pipeline_mode<synchronous>, transform_indices = @transform_7, window_bounds = array<i64: 1, 128>}, {transform_indices = @transform_8, window_bounds = array<i64: 1, 16, 128>}]} {
    %cst = arith.constant 0.000000e+00 : bf16
    %0 = vector.broadcast %cst : bf16 to vector<1x1x64xbf16>
    %cst_0 = arith.constant 0.000000e+00 : bf16
    %1 = vector.broadcast %cst_0 : bf16 to vector<1x1x128xbf16>
    %c0 = arith.constant 0 : index
    %c0_1 = arith.constant 0 : index
    %c0_2 = arith.constant 0 : index
    %2 = vector.load %arg10[%c0, %c0_1, %c0_2] : memref<1x18x64xbf16, #tpu.memory_space<vmem>>, vector<1x1x64xbf16>
    tpu.vector_store %arg10[%c0, %c0_1, %c0_2], %0 {strides = array<i32>} : memref<1x18x64xbf16, #tpu.memory_space<vmem>>, vector<1x1x64xbf16>,
    %c0_3 = arith.constant 0 : index
    %c17 = arith.constant 17 : index
    %c0_4 = arith.constant 0 : index
    %3 = vector.load %arg10[%c0_3, %c17, %c0_4] : memref<1x18x64xbf16, #tpu.memory_space<vmem>>, vector<1x1x64xbf16>
    tpu.vector_store %arg10[%c0_3, %c17, %c0_4], %0 {strides = array<i32>} : memref<1x18x64xbf16, #tpu.memory_space<vmem>>, vector<1x1x64xbf16>,
    %c0_5 = arith.constant 0 : index
    %c0_6 = arith.constant 0 : index
    %c0_7 = arith.constant 0 : index
    %4 = vector.load %arg12[%c0_5, %c0_6, %c0_7] : memref<1x18x128xbf16, #tpu.memory_space<vmem>>, vector<1x1x128xbf16>
    tpu.vector_store %arg12[%c0_5, %c0_6, %c0_7], %1 {strides = array<i32>} : memref<1x18x128xbf16, #tpu.memory_space<vmem>>, vector<1x1x128xbf16>,
    %c0_8 = arith.constant 0 : index
    %c17_9 = arith.constant 17 : index
    %c0_10 = arith.constant 0 : index
    %5 = vector.load %arg12[%c0_8, %c17_9, %c0_10] : memref<1x18x128xbf16, #tpu.memory_space<vmem>>, vector<1x1x128xbf16>
    tpu.vector_store %arg12[%c0_8, %c17_9, %c0_10], %1 {strides = array<i32>} : memref<1x18x128xbf16, #tpu.memory_space<vmem>>, vector<1x1x128xbf16>,
    %c0_11 = arith.constant 0 : index
    %c0_12 = arith.constant 0 : index
    %c0_13 = arith.constant 0 : index
    %6 = vector.load %arg1[%c0_11, %c0_12, %c0_13] : memref<1x16x64xbf16, #tpu.memory_space<vmem>>, vector<1x16x64xbf16>
    %c0_14 = arith.constant 0 : index
    %c1 = arith.constant 1 : index
    %c0_15 = arith.constant 0 : index
    %7 = vector.load %arg10[%c0_14, %c1, %c0_15] : memref<1x18x64xbf16, #tpu.memory_space<vmem>>, vector<1x16x64xbf16>
    tpu.vector_store %arg10[%c0_14, %c1, %c0_15], %6 {strides = array<i32>} : memref<1x18x64xbf16, #tpu.memory_space<vmem>>, vector<1x16x64xbf16>,
    %c0_16 = arith.constant 0 : index
    %c0_17 = arith.constant 0 : index
    %8 = vector.load %arg3[%c0_16, %c0_17] : memref<18x8xbf16, #tpu.memory_space<vmem>>, vector<18x8xbf16>
    %c0_18 = arith.constant 0 : index
    %c0_19 = arith.constant 0 : index
    %c0_20 = arith.constant 0 : index
    %9 = vector.load %arg2[%c0_18, %c0_19, %c0_20] : memref<1x8x32xbf16, #tpu.memory_space<vmem>>, vector<1x8x32xbf16>
    %10 = vector.shape_cast %9 : vector<1x8x32xbf16> to vector<8x32xbf16>
    %cst_21 = arith.constant dense<0.000000e+00> : vector<18x32xf32>
    %11 = tpu.matmul %8, %10, %cst_21 {dimension_numbers = #tpu.dot_dimension_numbers<[1], [0], [0], [1], [0, 0, 1, 1], [], []>} : vector<18x8xbf16>, vector<8x32xbf16>, vector<18x32xf32> -> vector<18x32xf32>
    %12 = arith.truncf %11 : vector<18x32xf32> to vector<18x32xbf16>
    %c0_22 = arith.constant 0 : index
    %c0_23 = arith.constant 0 : index
    %c0_24 = arith.constant 0 : index
    %13 = vector.load %arg11[%c0_22, %c0_23, %c0_24] : memref<1x18x32xbf16, #tpu.memory_space<vmem>>, vector<1x18x32xbf16>
    %14 = vector.shape_cast %13 : vector<1x18x32xbf16> to vector<18x32xbf16>
    %15 = vector.shape_cast %12 : vector<18x32xbf16> to vector<1x18x32xbf16>
    tpu.vector_store %arg11[%c0_22, %c0_23, %c0_24], %15 {strides = array<i32>} : memref<1x18x32xbf16, #tpu.memory_space<vmem>>, vector<1x18x32xbf16>,
    %cst_25 = arith.constant 0.000000e+00 : f32
    %16 = vector.broadcast %cst_25 : f32 to vector<16x128xf32>
    %c0_26 = arith.constant 0 : index
    %c0_27 = arith.constant 0 : index
    %c0_28 = arith.constant 0 : index
    %17 = vector.load %arg10[%c0_26, %c0_27, %c0_28] : memref<1x18x64xbf16, #tpu.memory_space<vmem>>, vector<1x16x64xbf16>
    %18 = vector.shape_cast %17 : vector<1x16x64xbf16> to vector<16x64xbf16>
    %c0_29 = arith.constant 0 : index
    %c0_30 = arith.constant 0 : index
    %c0_31 = arith.constant 0 : index
    %19 = vector.load %arg11[%c0_29, %c0_30, %c0_31] : memref<1x18x32xbf16, #tpu.memory_space<vmem>>, vector<1x16x32xbf16>
    %20 = vector.shape_cast %19 : vector<1x16x32xbf16> to vector<16x32xbf16>
    %c0_32 = arith.constant 0 : index
    %c0_33 = arith.constant 0 : index
    %c0_34 = arith.constant 0 : index
    %21 = vector.load %arg4[%c0_32, %c0_33, %c0_34] : memref<3x64x128xbf16, #tpu.memory_space<vmem>>, vector<1x64x128xbf16>
    %22 = vector.shape_cast %21 : vector<1x64x128xbf16> to vector<64x128xbf16>
    %cst_35 = arith.constant dense<0.000000e+00> : vector<16x128xf32>
    %23 = tpu.matmul %18, %22, %cst_35 {dimension_numbers = #tpu.dot_dimension_numbers<[1], [0], [0], [1], [0, 0, 1, 1], [], []>} : vector<16x64xbf16>, vector<64x128xbf16>, vector<16x128xf32> -> vector<16x128xf32>
    %24 = arith.addf %16, %23 : vector<16x128xf32>
    %c0_36 = arith.constant 0 : index
    %c0_37 = arith.constant 0 : index
    %c0_38 = arith.constant 0 : index
    %25 = vector.load %arg5[%c0_36, %c0_37, %c0_38] : memref<3x32x128xbf16, #tpu.memory_space<vmem>>, vector<1x32x128xbf16>
    %26 = vector.shape_cast %25 : vector<1x32x128xbf16> to vector<32x128xbf16>
    %cst_39 = arith.constant dense<0.000000e+00> : vector<16x128xf32>
    %27 = tpu.matmul %20, %26, %cst_39 {dimension_numbers = #tpu.dot_dimension_numbers<[1], [0], [0], [1], [0, 0, 1, 1], [], []>} : vector<16x32xbf16>, vector<32x128xbf16>, vector<16x128xf32> -> vector<16x128xf32>
    %28 = arith.addf %24, %27 : vector<16x128xf32>
    %c0_40 = arith.constant 0 : index
    %c1_41 = arith.constant 1 : index
    %c0_42 = arith.constant 0 : index
    %29 = vector.load %arg10[%c0_40, %c1_41, %c0_42] : memref<1x18x64xbf16, #tpu.memory_space<vmem>>, vector<1x16x64xbf16>
    %30 = vector.shape_cast %29 : vector<1x16x64xbf16> to vector<16x64xbf16>
    %c0_43 = arith.constant 0 : index
    %c1_44 = arith.constant 1 : index
    %c0_45 = arith.constant 0 : index
    %31 = vector.load %arg11[%c0_43, %c1_44, %c0_45] : memref<1x18x32xbf16, #tpu.memory_space<vmem>>, vector<1x16x32xbf16>
    %32 = vector.shape_cast %31 : vector<1x16x32xbf16> to vector<16x32xbf16>
    %c1_46 = arith.constant 1 : index
    %c0_47 = arith.constant 0 : index
    %c0_48 = arith.constant 0 : index
    %33 = vector.load %arg4[%c1_46, %c0_47, %c0_48] : memref<3x64x128xbf16, #tpu.memory_space<vmem>>, vector<1x64x128xbf16>
    %34 = vector.shape_cast %33 : vector<1x64x128xbf16> to vector<64x128xbf16>
    %cst_49 = arith.constant dense<0.000000e+00> : vector<16x128xf32>
    %35 = tpu.matmul %30, %34, %cst_49 {dimension_numbers = #tpu.dot_dimension_numbers<[1], [0], [0], [1], [0, 0, 1, 1], [], []>} : vector<16x64xbf16>, vector<64x128xbf16>, vector<16x128xf32> -> vector<16x128xf32>
    %36 = arith.addf %28, %35 : vector<16x128xf32>
    %c1_50 = arith.constant 1 : index
    %c0_51 = arith.constant 0 : index
    %c0_52 = arith.constant 0 : index
    %37 = vector.load %arg5[%c1_50, %c0_51, %c0_52] : memref<3x32x128xbf16, #tpu.memory_space<vmem>>, vector<1x32x128xbf16>
    %38 = vector.shape_cast %37 : vector<1x32x128xbf16> to vector<32x128xbf16>
    %cst_53 = arith.constant dense<0.000000e+00> : vector<16x128xf32>
    %39 = tpu.matmul %32, %38, %cst_53 {dimension_numbers = #tpu.dot_dimension_numbers<[1], [0], [0], [1], [0, 0, 1, 1], [], []>} : vector<16x32xbf16>, vector<32x128xbf16>, vector<16x128xf32> -> vector<16x128xf32>
    %40 = arith.addf %36, %39 : vector<16x128xf32>
    %c0_54 = arith.constant 0 : index
    %c2 = arith.constant 2 : index
    %c0_55 = arith.constant 0 : index
    %41 = vector.load %arg10[%c0_54, %c2, %c0_55] : memref<1x18x64xbf16, #tpu.memory_space<vmem>>, vector<1x16x64xbf16>
    %42 = vector.shape_cast %41 : vector<1x16x64xbf16> to vector<16x64xbf16>
    %c0_56 = arith.constant 0 : index
    %c2_57 = arith.constant 2 : index
    %c0_58 = arith.constant 0 : index
    %43 = vector.load %arg11[%c0_56, %c2_57, %c0_58] : memref<1x18x32xbf16, #tpu.memory_space<vmem>>, vector<1x16x32xbf16>
    %44 = vector.shape_cast %43 : vector<1x16x32xbf16> to vector<16x32xbf16>
    %c2_59 = arith.constant 2 : index
    %c0_60 = arith.constant 0 : index
    %c0_61 = arith.constant 0 : index
    %45 = vector.load %arg4[%c2_59, %c0_60, %c0_61] : memref<3x64x128xbf16, #tpu.memory_space<vmem>>, vector<1x64x128xbf16>
    %46 = vector.shape_cast %45 : vector<1x64x128xbf16> to vector<64x128xbf16>
    %cst_62 = arith.constant dense<0.000000e+00> : vector<16x128xf32>
    %47 = tpu.matmul %42, %46, %cst_62 {dimension_numbers = #tpu.dot_dimension_numbers<[1], [0], [0], [1], [0, 0, 1, 1], [], []>} : vector<16x64xbf16>, vector<64x128xbf16>, vector<16x128xf32> -> vector<16x128xf32>
    %48 = arith.addf %40, %47 : vector<16x128xf32>
    %c2_63 = arith.constant 2 : index
    %c0_64 = arith.constant 0 : index
    %c0_65 = arith.constant 0 : index
    %49 = vector.load %arg5[%c2_63, %c0_64, %c0_65] : memref<3x32x128xbf16, #tpu.memory_space<vmem>>, vector<1x32x128xbf16>
    %50 = vector.shape_cast %49 : vector<1x32x128xbf16> to vector<32x128xbf16>
    %cst_66 = arith.constant dense<0.000000e+00> : vector<16x128xf32>
    %51 = tpu.matmul %44, %50, %cst_66 {dimension_numbers = #tpu.dot_dimension_numbers<[1], [0], [0], [1], [0, 0, 1, 1], [], []>} : vector<16x32xbf16>, vector<32x128xbf16>, vector<16x128xf32> -> vector<16x128xf32>
    %52 = arith.addf %48, %51 : vector<16x128xf32>
    %c0_67 = arith.constant 0 : index
    %c0_68 = arith.constant 0 : index
    %53 = vector.load %arg6[%c0_67, %c0_68] : memref<1x128xf32, #tpu.memory_space<vmem>>, vector<1x128xf32>
    %54 = vector.broadcast %53 : vector<1x128xf32> to vector<16x128xf32>
    %55 = arith.addf %52, %54 : vector<16x128xf32>
    %cst_69 = arith.constant 0.000000e+00 : f32
    %56 = vector.broadcast %cst_69 : f32 to vector<16x128xf32>
    %57 = arith.maximumf %55, %56 : vector<16x128xf32>
    %58 = vector.shape_cast %57 : vector<16x128xf32> to vector<1x16x128xf32>
    %59 = arith.truncf %58 : vector<1x16x128xf32> to vector<1x16x128xbf16>
    %c0_70 = arith.constant 0 : index
    %c1_71 = arith.constant 1 : index
    %c0_72 = arith.constant 0 : index
    %60 = vector.load %arg12[%c0_70, %c1_71, %c0_72] : memref<1x18x128xbf16, #tpu.memory_space<vmem>>, vector<1x16x128xbf16>
    tpu.vector_store %arg12[%c0_70, %c1_71, %c0_72], %59 {strides = array<i32>} : memref<1x18x128xbf16, #tpu.memory_space<vmem>>, vector<1x16x128xbf16>,
    %cst_73 = arith.constant 0.000000e+00 : f32
    %61 = vector.broadcast %cst_73 : f32 to vector<16x128xf32>
    %c0_74 = arith.constant 0 : index
    %c0_75 = arith.constant 0 : index
    %c0_76 = arith.constant 0 : index
    %62 = vector.load %arg12[%c0_74, %c0_75, %c0_76] : memref<1x18x128xbf16, #tpu.memory_space<vmem>>, vector<1x16x128xbf16>
    %63 = vector.shape_cast %62 : vector<1x16x128xbf16> to vector<16x128xbf16>
    %c0_77 = arith.constant 0 : index
    %c0_78 = arith.constant 0 : index
    %c0_79 = arith.constant 0 : index
    %64 = vector.load %arg7[%c0_77, %c0_78, %c0_79] : memref<3x128x128xbf16, #tpu.memory_space<vmem>>, vector<1x128x128xbf16>
    %65 = vector.shape_cast %64 : vector<1x128x128xbf16> to vector<128x128xbf16>
    %cst_80 = arith.constant dense<0.000000e+00> : vector<16x128xf32>
    %66 = tpu.matmul %63, %65, %cst_80 {dimension_numbers = #tpu.dot_dimension_numbers<[1], [0], [0], [1], [0, 0, 1, 1], [], []>} : vector<16x128xbf16>, vector<128x128xbf16>, vector<16x128xf32> -> vector<16x128xf32>
    %67 = arith.addf %61, %66 : vector<16x128xf32>
    %c0_81 = arith.constant 0 : index
    %c1_82 = arith.constant 1 : index
    %c0_83 = arith.constant 0 : index
    %68 = vector.load %arg12[%c0_81, %c1_82, %c0_83] : memref<1x18x128xbf16, #tpu.memory_space<vmem>>, vector<1x16x128xbf16>
    %69 = vector.shape_cast %68 : vector<1x16x128xbf16> to vector<16x128xbf16>
    %c1_84 = arith.constant 1 : index
    %c0_85 = arith.constant 0 : index
    %c0_86 = arith.constant 0 : index
    %70 = vector.load %arg7[%c1_84, %c0_85, %c0_86] : memref<3x128x128xbf16, #tpu.memory_space<vmem>>, vector<1x128x128xbf16>
    %71 = vector.shape_cast %70 : vector<1x128x128xbf16> to vector<128x128xbf16>
    %cst_87 = arith.constant dense<0.000000e+00> : vector<16x128xf32>
    %72 = tpu.matmul %69, %71, %cst_87 {dimension_numbers = #tpu.dot_dimension_numbers<[1], [0], [0], [1], [0, 0, 1, 1], [], []>} : vector<16x128xbf16>, vector<128x128xbf16>, vector<16x128xf32> -> vector<16x128xf32>
    %73 = arith.addf %67, %72 : vector<16x128xf32>
    %c0_88 = arith.constant 0 : index
    %c2_89 = arith.constant 2 : index
    %c0_90 = arith.constant 0 : index
    %74 = vector.load %arg12[%c0_88, %c2_89, %c0_90] : memref<1x18x128xbf16, #tpu.memory_space<vmem>>, vector<1x16x128xbf16>
    %75 = vector.shape_cast %74 : vector<1x16x128xbf16> to vector<16x128xbf16>
    %c2_91 = arith.constant 2 : index
    %c0_92 = arith.constant 0 : index
    %c0_93 = arith.constant 0 : index
    %76 = vector.load %arg7[%c2_91, %c0_92, %c0_93] : memref<3x128x128xbf16, #tpu.memory_space<vmem>>, vector<1x128x128xbf16>
    %77 = vector.shape_cast %76 : vector<1x128x128xbf16> to vector<128x128xbf16>
    %cst_94 = arith.constant dense<0.000000e+00> : vector<16x128xf32>
    %78 = tpu.matmul %75, %77, %cst_94 {dimension_numbers = #tpu.dot_dimension_numbers<[1], [0], [0], [1], [0, 0, 1, 1], [], []>} : vector<16x128xbf16>, vector<128x128xbf16>, vector<16x128xf32> -> vector<16x128xf32>
    %79 = arith.addf %73, %78 : vector<16x128xf32>
    %c0_95 = arith.constant 0 : index
    %c0_96 = arith.constant 0 : index
    %80 = vector.load %arg8[%c0_95, %c0_96] : memref<1x128xf32, #tpu.memory_space<vmem>>, vector<1x128xf32>
    %81 = vector.broadcast %80 : vector<1x128xf32> to vector<16x128xf32>
    %82 = arith.addf %79, %81 : vector<16x128xf32>
    %cst_97 = arith.constant 0.000000e+00 : f32
    %83 = vector.broadcast %cst_97 : f32 to vector<16x128xf32>
    %84 = arith.maximumf %82, %83 : vector<16x128xf32>
    %85 = vector.shape_cast %84 : vector<16x128xf32> to vector<1x16x128xf32>
    %c0_98 = arith.constant 0 : index
    %c0_99 = arith.constant 0 : index
    %c0_100 = arith.constant 0 : index
    %86 = vector.load %arg9[%c0_98, %c0_99, %c0_100] : memref<1x16x128xf32, #tpu.memory_space<vmem>>, vector<1x16x128xf32>
    tpu.vector_store %arg9[%c0_98, %c0_99, %c0_100], %85 {strides = array<i32>} : memref<1x16x128xf32, #tpu.memory_space<vmem>>, vector<1x16x128xf32>,
    return
  }
  func.func @transform_0(%arg0: i32) -> (i32, i32, i32) {
    %c0_i32 = arith.constant 0 : i32
    %c0_i32_0 = arith.constant 0 : i32
    %c0_i32_1 = arith.constant 0 : i32
    return %arg0, %c0_i32, %c0_i32_0 : i32, i32, i32
  }
  func.func @transform_1(%arg0: i32) -> (i32, i32, i32) {
    %c0_i32 = arith.constant 0 : i32
    %c0_i32_0 = arith.constant 0 : i32
    %c0_i32_1 = arith.constant 0 : i32
    return %arg0, %c0_i32, %c0_i32_0 : i32, i32, i32
  }
  func.func @transform_2(%arg0: i32) -> (i32, i32) {
    %c0_i32 = arith.constant 0 : i32
    %c0_i32_0 = arith.constant 0 : i32
    %c0_i32_1 = arith.constant 0 : i32
    return %c0_i32, %c0_i32_0 : i32, i32
  }
  func.func @transform_3(%arg0: i32) -> (i32, i32, i32) {
    %c0_i32 = arith.constant 0 : i32
    %c0_i32_0 = arith.constant 0 : i32
    %c0_i32_1 = arith.constant 0 : i32
    %c0_i32_2 = arith.constant 0 : i32
    return %c0_i32, %c0_i32_0, %c0_i32_1 : i32, i32, i32
  }
  func.func @transform_4(%arg0: i32) -> (i32, i32, i32) {
    %c0_i32 = arith.constant 0 : i32
    %c0_i32_0 = arith.constant 0 : i32
    %c0_i32_1 = arith.constant 0 : i32
    %c0_i32_2 = arith.constant 0 : i32
    return %c0_i32, %c0_i32_0, %c0_i32_1 : i32, i32, i32
  }
  func.func @transform_5(%arg0: i32) -> (i32, i32) {
    %c0_i32 = arith.constant 0 : i32
    %c0_i32_0 = arith.constant 0 : i32
    %c0_i32_1 = arith.constant 0 : i32
    return %c0_i32, %c0_i32_0 : i32, i32
  }
  func.func @transform_6(%arg0: i32) -> (i32, i32, i32) {
    %c0_i32 = arith.constant 0 : i32
    %c0_i32_0 = arith.constant 0 : i32
    %c0_i32_1 = arith.constant 0 : i32
    %c0_i32_2 = arith.constant 0 : i32
    return %c0_i32, %c0_i32_0, %c0_i32_1 : i32, i32, i32
  }
  func.func @transform_7(%arg0: i32) -> (i32, i32) {
    %c0_i32 = arith.constant 0 : i32
    %c0_i32_0 = arith.constant 0 : i32
    %c0_i32_1 = arith.constant 0 : i32
    return %c0_i32, %c0_i32_0 : i32, i32
  }
  func.func @transform_8(%arg0: i32) -> (i32, i32, i32) {
    %c0_i32 = arith.constant 0 : i32
    %c0_i32_0 = arith.constant 0 : i32
    %c0_i32_1 = arith.constant 0 : i32
    return %arg0, %c0_i32, %c0_i32_0 : i32, i32, i32
  }
}

</mosaic_0001>

<llo_original>
// kernel: tpu_custom_call.1
$region0: #{tpu_custom_call.1}
  #allocation0 [shape = 'u32[]', space=smem, size = 0x4, offset = 0x4, fixed_abs, tag = 'smem constant byte address 0x4 - core index']
  #allocation1 [shape = 'u32[144,128]{1,0:T(1,128)}', space=vmem, size = 0x12000, scoped, tag = 'internal scratch']
  #allocation2 [shape = 'bf16[1,18,64]{2,1,0:T(8,128)(2,1)}', space=vmem, size = 0x1800, scoped, tag = 'scratch operand']
  #allocation3 [shape = 'bf16[1,18,32]{2,1,0:T(8,128)(2,1)}', space=vmem, size = 0x1800, scoped, tag = 'scratch operand']
  #allocation4 [shape = 'bf16[1,18,128]{2,1,0:T(8,128)(2,1)}', space=vmem, size = 0x1800, scoped, tag = 'scratch operand']
  %s0 = inlined_call_operand.vmem [shape: bf16[2,16,64], index: 0, kind: input, shape index: {}]
  %s1 = inlined_call_operand.hbm [shape: bf16[2,8,32], index: 1, kind: input, shape index: {}]
  %s2 = inlined_call_operand.vmem [shape: bf16[18,8], index: 2, kind: input, shape index: {}]
  %s3 = inlined_call_operand.hbm [shape: bf16[3,64,128], index: 3, kind: input, shape index: {}]
  %s4 = inlined_call_operand.hbm [shape: bf16[3,32,128], index: 4, kind: input, shape index: {}]
  %s5 = inlined_call_operand.vmem [shape: f32[1,128], index: 5, kind: input, shape index: {}]
  %s6 = inlined_call_operand.hbm [shape: bf16[3,128,128], index: 6, kind: input, shape index: {}]
  %s7 = inlined_call_operand.vmem [shape: f32[1,128], index: 7, kind: input, shape index: {}]
  %s8 = inlined_call_operand.hbm [shape: f32[2,16,128], index: 8, kind: output, shape index: {}]
  %s9 = sld [smem:[#allocation0]]
  $region81: #{tpu_custom_call.1} parent=0
    _
  %s11 = ssub.s32 1, %s9
  %s12 = scalar_select 0, %s11, %s9
  $region1: #{tpu_custom_call.1} parent=0
    #allocation5 [shape = 'u8[4096]{0}', space=vmem, size = 0x1000, scoped, tag = 'input window, operand 1']
    #allocation6 [shape = 's32[2]{0}', space=sflag, size = 0x8, scoped, tag = 'scoped memory for tpu_custom_call.1']
    #allocation7 [shape = 's32[2]{0}', space=sflag, size = 0x8, scoped, tag = 'scoped memory for tpu_custom_call.1']
    #allocation8 [shape = 'u8[49152]{0}', space=vmem, size = 0xc000, scoped, tag = 'input window, operand 3, single buffered']
    #allocation9 [shape = 's32[1]{0}', space=sflag, size = 0x4, scoped, tag = 'scoped memory for tpu_custom_call.1']
    #allocation10 [shape = 'u8[24576]{0}', space=vmem, size = 0x6000, scoped, tag = 'input window, operand 4, single buffered']
    #allocation11 [shape = 'u8[98304]{0}', space=vmem, size = 0x18000, scoped, tag = 'input window, operand 6, single buffered']
    #allocation12 [shape = 's32[1]{0}', space=sflag, size = 0x4, scoped, tag = 'scoped memory for tpu_custom_call.1']
    #allocation13 [shape = 'u8[16384]{0}', space=vmem, size = 0x4000, scoped, tag = 'output window, operand 0']
    %13 = vsyncpa [#allocation6], 0
    %s14 = scalar_lea.sflag [#allocation6], 1
    %15 = vsyncpa %s14, 0
    %16 = vsyncpa [#allocation9], 0
    %17 = vsyncpa [#allocation12], 0
    %18 = vsyncpa [#allocation7], 0
    %s19 = scalar_lea.sflag [#allocation7], 1
    %20 = vsyncpa %s19, 0
    loop: start=0, step=1, limit=4
    $region2: #{tpu_custom_call.1} parent=1 // loop_pre_header
      _
    $region3: #{tpu_custom_call.1} parent=1 // loop_header
      %s22 = sphi 0, %s26
      %p23 = scmp.ge.s32.totalorder %s22, 4
      %s32 = sphi 0, %s34
      %s35 = sphi 0, %s32
      %s36 = sphi 0, %s35
      %s52 = sphi 0, %s36
      %s58 = sphi 0, %s60
      %s61 = sphi 0, %s58
      %s62 = sphi 0, %s61
      %s78 = sphi 0, %s62
      %s82 = sphi 0, %s82
      %s84 = sphi 0, %s82
      %s85 = sphi 0, %s84
      %s99 = sphi 0, %s85
      %s103 = sphi 0, %s103
      %s105 = sphi 0, %s103
      %s106 = sphi 0, %s105
      %s120 = sphi 0, %s106
      %s124 = sphi 0, %s124
      %s126 = sphi 0, %s124
      %s127 = sphi 0, %s126
      %s141 = sphi 0, %s127
      %s145 = sphi 0, %s145
      %s147 = sphi 0, %s145
      %s148 = sphi 0, %s147
      %s162 = sphi 0, %s148
      %s166 = sphi 0, %s166
      %s168 = sphi 0, %s166
      %s169 = sphi 0, %s168
      %s183 = sphi 0, %s169
      %s187 = sphi 0, %s187
      %s189 = sphi 0, %s187
      %s190 = sphi 0, %s189
      %s204 = sphi 0, %s190
      %s210 = sphi 0, %s212
      %s213 = sphi 0, %s210
      %s214 = sphi 0, %s213
      %s230 = sphi 0, %s214
    $region4: #{tpu_custom_call.1} parent=1 // loop_header_branch
      %25 = sbr.rel (%p23) target = $region8
    $region5: #{tpu_custom_call.1} parent=1 // loop_body
      %s27 = ssub.s32 %s22, 1
      %s28 = ssub.s32 %s22, 2
      %s29 = sadd.s32 %s22, 1
      %s30 = ssub.s32 %s22, %s29
      %p31 = scmp.eq.s32.totalorder %s30, 0
      %s33 = sadd.s32 %s32, 1
      %s34 = scalar_select %p31, %s32, %s33
      %p37 = pneg %p31
      %p38 = scmp.eq.s32.totalorder %s22, 1
      %p39 = por %p37, %p38
      %p40 = scmp.ne.s32.totalorder %s32, %s35
      %p41 = scmp.eq.s32.totalorder %s22, 0
      %p42 = por %p40, %p41
      %p43 = scmp.ne.s32.totalorder %s32, %s35
      %p44 = scmp.eq.s32.totalorder %s27, 1
      %p45 = por %p43, %p44
      %p46 = scmp.ne.s32.totalorder %s35, %s36
      %p47 = scmp.eq.s32.totalorder %s27, 0
      %p48 = por %p46, %p47
      %p49 = scmp.ne.s32.totalorder %s35, %s36
      %p50 = scmp.eq.s32.totalorder %s28, 1
      %p51 = por %p49, %p50
      %p53 = scmp.ne.s32.totalorder %s36, %s52
      %p54 = scmp.eq.s32.totalorder %s28, 0
      %p55 = por %p53, %p54
      %s56 = ssub.s32 %s22, %s29
      %p57 = scmp.eq.s32.totalorder %s56, 0
      %s59 = sadd.s32 %s58, 1
      %s60 = scalar_select %p57, %s58, %s59
      %p63 = pneg %p57
      %p64 = scmp.eq.s32.totalorder %s22, 1
      %p65 = por %p63, %p64
      %p66 = scmp.ne.s32.totalorder %s58, %s61
      %p67 = scmp.eq.s32.totalorder %s22, 0
      %p68 = por %p66, %p67
      %p69 = scmp.ne.s32.totalorder %s58, %s61
      %p70 = scmp.eq.s32.totalorder %s27, 1
      %p71 = por %p69, %p70
      %p72 = scmp.ne.s32.totalorder %s61, %s62
      %p73 = scmp.eq.s32.totalorder %s27, 0
      %p74 = por %p72, %p73
      %p75 = scmp.ne.s32.totalorder %s61, %s62
      %p76 = scmp.eq.s32.totalorder %s28, 1
      %p77 = por %p75, %p76
      %p79 = scmp.ne.s32.totalorder %s62, %s78
      %p80 = scmp.eq.s32.totalorder %s28, 0
      %p81 = por %p79, %p80
      %s83 = sadd.s32 %s82, 1
      %p86 = scmp.eq.s32.totalorder %s22, 1
      %p87 = scmp.ne.s32.totalorder %s82, %s84
      %p88 = scmp.eq.s32.totalorder %s22, 0
      %p89 = por %p87, %p88
      %p90 = scmp.ne.s32.totalorder %s82, %s84
      %p91 = scmp.eq.s32.totalorder %s27, 1
      %p92 = por %p90, %p91
      %p93 = scmp.ne.s32.totalorder %s84, %s85
      %p94 = scmp.eq.s32.totalorder %s27, 0
      %p95 = por %p93, %p94
      %p96 = scmp.ne.s32.totalorder %s84, %s85
      %p97 = scmp.eq.s32.totalorder %s28, 1
      %p98 = por %p96, %p97
      %p100 = scmp.ne.s32.totalorder %s85, %s99
      %p101 = scmp.eq.s32.totalorder %s28, 0
      %p102 = por %p100, %p101
      %s104 = sadd.s32 %s103, 1
      %p107 = scmp.eq.s32.totalorder %s22, 1
      %p108 = scmp.ne.s32.totalorder %s103, %s105
      %p109 = scmp.eq.s32.totalorder %s22, 0
      %p110 = por %p108, %p109
      %p111 = scmp.ne.s32.totalorder %s103, %s105
      %p112 = scmp.eq.s32.totalorder %s27, 1
      %p113 = por %p111, %p112
      %p114 = scmp.ne.s32.totalorder %s105, %s106
      %p115 = scmp.eq.s32.totalorder %s27, 0
      %p116 = por %p114, %p115
      %p117 = scmp.ne.s32.totalorder %s105, %s106
      %p118 = scmp.eq.s32.totalorder %s28, 1
      %p119 = por %p117, %p118
      %p121 = scmp.ne.s32.totalorder %s106, %s120
      %p122 = scmp.eq.s32.totalorder %s28, 0
      %p123 = por %p121, %p122
      %s125 = sadd.s32 %s124, 1
      %p128 = scmp.eq.s32.totalorder %s22, 1
      %p129 = scmp.ne.s32.totalorder %s124, %s126
      %p130 = scmp.eq.s32.totalorder %s22, 0
      %p131 = por %p129, %p130
      %p132 = scmp.ne.s32.totalorder %s124, %s126
      %p133 = scmp.eq.s32.totalorder %s27, 1
      %p134 = por %p132, %p133
      %p135 = scmp.ne.s32.totalorder %s126, %s127
      %p136 = scmp.eq.s32.totalorder %s27, 0
      %p137 = por %p135, %p136
      %p138 = scmp.ne.s32.totalorder %s126, %s127
      %p139 = scmp.eq.s32.totalorder %s28, 1
      %p140 = por %p138, %p139
      %p142 = scmp.ne.s32.totalorder %s127, %s141
      %p143 = scmp.eq.s32.totalorder %s28, 0
      %p144 = por %p142, %p143
      %s146 = sadd.s32 %s145, 1
      %p149 = scmp.eq.s32.totalorder %s22, 1
      %p150 = scmp.ne.s32.totalorder %s145, %s147
      %p151 = scmp.eq.s32.totalorder %s22, 0
      %p152 = por %p150, %p151
      %p153 = scmp.ne.s32.totalorder %s145, %s147
      %p154 = scmp.eq.s32.totalorder %s27, 1
      %p155 = por %p153, %p154
      %p156 = scmp.ne.s32.totalorder %s147, %s148
      %p157 = scmp.eq.s32.totalorder %s27, 0
      %p158 = por %p156, %p157
      %p159 = scmp.ne.s32.totalorder %s147, %s148
      %p160 = scmp.eq.s32.totalorder %s28, 1
      %p161 = por %p159, %p160
      %p163 = scmp.ne.s32.totalorder %s148, %s162
      %p164 = scmp.eq.s32.totalorder %s28, 0
      %p165 = por %p163, %p164
      %s167 = sadd.s32 %s166, 1
      %p170 = scmp.eq.s32.totalorder %s22, 1
      %p171 = scmp.ne.s32.totalorder %s166, %s168
      %p172 = scmp.eq.s32.totalorder %s22, 0
      %p173 = por %p171, %p172
      %p174 = scmp.ne.s32.totalorder %s166, %s168
      %p175 = scmp.eq.s32.totalorder %s27, 1
      %p176 = por %p174, %p175
      %p177 = scmp.ne.s32.totalorder %s168, %s169
      %p178 = scmp.eq.s32.totalorder %s27, 0
      %p179 = por %p177, %p178
      %p180 = scmp.ne.s32.totalorder %s168, %s169
      %p181 = scmp.eq.s32.totalorder %s28, 1
      %p182 = por %p180, %p181
      %p184 = scmp.ne.s32.totalorder %s169, %s183
      %p185 = scmp.eq.s32.totalorder %s28, 0
      %p186 = por %p184, %p185
      %s188 = sadd.s32 %s187, 1
      %p191 = scmp.eq.s32.totalorder %s22, 1
      %p192 = scmp.ne.s32.totalorder %s187, %s189
      %p193 = scmp.eq.s32.totalorder %s22, 0
      %p194 = por %p192, %p193
      %p195 = scmp.ne.s32.totalorder %s187, %s189
      %p196 = scmp.eq.s32.totalorder %s27, 1
      %p197 = por %p195, %p196
      %p198 = scmp.ne.s32.totalorder %s189, %s190
      %p199 = scmp.eq.s32.totalorder %s27, 0
      %p200 = por %p198, %p199
      %p201 = scmp.ne.s32.totalorder %s189, %s190
      %p202 = scmp.eq.s32.totalorder %s28, 1
      %p203 = por %p201, %p202
      %p205 = scmp.ne.s32.totalorder %s190, %s204
      %p206 = scmp.eq.s32.totalorder %s28, 0
      %p207 = por %p205, %p206
      %s208 = ssub.s32 %s22, %s29
      %p209 = scmp.eq.s32.totalorder %s208, 0
      %s211 = sadd.s32 %s210, 1
      %s212 = scalar_select %p209, %s210, %s211
      %p215 = pneg %p209
      %p216 = scmp.eq.s32.totalorder %s22, 1
      %p217 = por %p215, %p216
      %p218 = scmp.ne.s32.totalorder %s210, %s213
      %p219 = scmp.eq.s32.totalorder %s22, 0
      %p220 = por %p218, %p219
      %p221 = scmp.ne.s32.totalorder %s210, %s213
      %p222 = scmp.eq.s32.totalorder %s27, 1
      %p223 = por %p221, %p222
      %p224 = scmp.ne.s32.totalorder %s213, %s214
      %p225 = scmp.eq.s32.totalorder %s27, 0
      %p226 = por %p224, %p225
      %p227 = scmp.ne.s32.totalorder %s213, %s214
      %p228 = scmp.eq.s32.totalorder %s28, 1
      %p229 = por %p227, %p228
      %p231 = scmp.ne.s32.totalorder %s214, %s230
      %p232 = scmp.eq.s32.totalorder %s28, 0
      %p233 = por %p231, %p232
      %p234 = scmp.le.s32.totalorder 1, %s22
      %p235 = scmp.lt.s32.totalorder %s22, 3
      %p236 = pnand %p234, %p235
      %p237 = pneg %p236
      // Predicated region
      $region9: #{tpu_custom_call.1} parent=5 // pred_check
        _
      $region10: #{tpu_custom_call.1} parent=5 // pred_check_branch
        %239 = sbr.rel (%p236) target = $region12
      $region11: #{tpu_custom_call.1} parent=5 // pred_region
        %s240 = ssub.s32 %s22, 1
        // Predicated region
        $region13: #{tpu_custom_call.1} parent=11 // pred_check
          %p241 = pneg %p95
        $region14: #{tpu_custom_call.1} parent=11 // pred_check_branch
          %243 = sbr.rel (%p241) target = $region16
        $region15: #{tpu_custom_call.1} parent=11 // pred_region
          _
        $region16: #{tpu_custom_call.1} parent=11 // pred_fallthru
          _
        // Predicated region
        $region17: #{tpu_custom_call.1} parent=11 // pred_check
          %p244 = pneg %p116
        $region18: #{tpu_custom_call.1} parent=11 // pred_check_branch
          %246 = sbr.rel (%p244) target = $region20
        $region19: #{tpu_custom_call.1} parent=11 // pred_region
          %s248 = ssub.s32 1536, 1536
          %249 = vsyncadd [#allocation9], %s248
          %s250 = sshll.u32 [#allocation8], 4
          %s251 = int_to_ptr.vmem [resolvable:$true] %s250
          %256 = dma.hbm_to_vmem [thread:$0]  %s3, 1536, %s251, [#allocation9], 64, 64, 4
        $region20: #{tpu_custom_call.1} parent=11 // pred_fallthru
          _
        // Predicated region
        $region21: #{tpu_custom_call.1} parent=11 // pred_check
          %p257 = pneg %p137
        $region22: #{tpu_custom_call.1} parent=11 // pred_check_branch
          %259 = sbr.rel (%p257) target = $region24
        $region23: #{tpu_custom_call.1} parent=11 // pred_region
          %s261 = ssub.s32 768, 768
          %262 = vsyncadd [#allocation9], %s261
          %s263 = sshll.u32 [#allocation10], 4
          %s264 = int_to_ptr.vmem [resolvable:$true] %s263
          %269 = dma.hbm_to_vmem [thread:$0]  %s4, 768, %s264, [#allocation9], 64, 64, 4
        $region24: #{tpu_custom_call.1} parent=11 // pred_fallthru
          _
        // Predicated region
        $region25: #{tpu_custom_call.1} parent=11 // pred_check
          %p270 = pneg %p158
        $region26: #{tpu_custom_call.1} parent=11 // pred_check_branch
          %272 = sbr.rel (%p270) target = $region28
        $region27: #{tpu_custom_call.1} parent=11 // pred_region
          _
        $region28: #{tpu_custom_call.1} parent=11 // pred_fallthru
          _
        // Predicated region
        $region29: #{tpu_custom_call.1} parent=11 // pred_check
          %p273 = pneg %p179
        $region30: #{tpu_custom_call.1} parent=11 // pred_check_branch
          %275 = sbr.rel (%p273) target = $region32
        $region31: #{tpu_custom_call.1} parent=11 // pred_region
          %s277 = ssub.s32 3072, 3072
          %278 = vsyncadd [#allocation12], %s277
          %s279 = sshll.u32 [#allocation11], 4
          %s280 = int_to_ptr.vmem [resolvable:$true] %s279
          %285 = dma.hbm_to_vmem [thread:$0]  %s6, 3072, %s280, [#allocation12], 64, 64, 4
        $region32: #{tpu_custom_call.1} parent=11 // pred_fallthru
          _
        // Predicated region
        $region33: #{tpu_custom_call.1} parent=11 // pred_check
          %p286 = pneg %p200
        $region34: #{tpu_custom_call.1} parent=11 // pred_check_branch
          %288 = sbr.rel (%p286) target = $region36
        $region35: #{tpu_custom_call.1} parent=11 // pred_region
          _
        $region36: #{tpu_custom_call.1} parent=11 // pred_fallthru
          _
      $region12: #{tpu_custom_call.1} parent=5 // pred_fallthru
        _
      %p289 = scmp.lt.s32.totalorder %s22, 2
      // Predicated region
      $region37: #{tpu_custom_call.1} parent=5 // pred_check
        %p290 = pneg %p289
      $region38: #{tpu_custom_call.1} parent=5 // pred_check_branch
        %292 = sbr.rel (%p290) target = $region40
      $region39: #{tpu_custom_call.1} parent=5 // pred_region
        // Predicated region
        $region41: #{tpu_custom_call.1} parent=39 // pred_check
          %p293 = pneg %p42
        $region42: #{tpu_custom_call.1} parent=39 // pred_check_branch
          %295 = sbr.rel (%p293) target = $region44
        $region43: #{tpu_custom_call.1} parent=39 // pred_region
          %p296 = scmp.lt.s32.totalorder %s22, 1
          %s297 = scalar_select %p296, %s22, 1
          %s298 = smul.addr %s297, 2
          %s299 = smul.addr %s298, 4
          %s300 = scalar_lea.vmem %s0, %s299
        $region44: #{tpu_custom_call.1} parent=39 // pred_fallthru
          _
        // Predicated region
        $region45: #{tpu_custom_call.1} parent=39 // pred_check
          %p301 = pneg %p68
        $region46: #{tpu_custom_call.1} parent=39 // pred_check_branch
          %303 = sbr.rel (%p301) target = $region48
        $region47: #{tpu_custom_call.1} parent=39 // pred_region
          %s304 = sand.u32 %s58, 1
          %s305 = scalar_lea.sflag [#allocation6], %s304
          %s306 = sand.u32 %s58, 1
          %s307 = smul.addr %s306, 4
          %s308 = scalar_lea.vmem [#allocation5], %s307
          %s310 = ssub.s32 64, 64
          %311 = vsyncadd %s305, %s310
          %s312 = smul.addr %s22, 64
          %s313 = scalar_lea.hbm %s1, %s312
          %s315 = sshll.u32 %s308, 4
          %s316 = int_to_ptr.vmem [resolvable:$true] %s315
          %318 = dma.hbm_to_vmem [thread:$0]  %s313, 64, %s316, %s305
        $region48: #{tpu_custom_call.1} parent=39 // pred_fallthru
          _
      $region40: #{tpu_custom_call.1} parent=5 // pred_fallthru
        _
      %p319 = scmp.le.s32.totalorder 1, %s22
      %p320 = scmp.lt.s32.totalorder %s22, 3
      %p321 = pnand %p319, %p320
      %p322 = pneg %p321
      // Predicated region
      $region49: #{tpu_custom_call.1} parent=5 // pred_check
        _
      $region50: #{tpu_custom_call.1} parent=5 // pred_check_branch
        %324 = sbr.rel (%p321) target = $region52
      $region51: #{tpu_custom_call.1} parent=5 // pred_region
        %s325 = ssub.s32 %s22, 1
        %s326 = sand.u32 %s61, 1
        %s327 = scalar_lea.sflag [#allocation6], %s326
        %s328 = sand.u32 %s61, 1
        %s329 = smul.addr %s328, 4
        %s330 = scalar_lea.vmem [#allocation5], %s329
        // Predicated region
        $region53: #{tpu_custom_call.1} parent=51 // pred_check
          %p331 = pneg %p74
        $region54: #{tpu_custom_call.1} parent=51 // pred_check_branch
          %333 = sbr.rel (%p331) target = $region56
        $region55: #{tpu_custom_call.1} parent=51 // pred_region
          %334 = dma.done %s327, 64
        $region56: #{tpu_custom_call.1} parent=51 // pred_fallthru
          _
        // Predicated region
        $region57: #{tpu_custom_call.1} parent=51 // pred_check
          %p335 = pneg %p116
        $region58: #{tpu_custom_call.1} parent=51 // pred_check_branch
          %337 = sbr.rel (%p335) target = $region60
        $region59: #{tpu_custom_call.1} parent=51 // pred_region
          %338 = dma.done [#allocation9], 1536
        $region60: #{tpu_custom_call.1} parent=51 // pred_fallthru
          _
        // Predicated region
        $region61: #{tpu_custom_call.1} parent=51 // pred_check
          %p339 = pneg %p137
        $region62: #{tpu_custom_call.1} parent=51 // pred_check_branch
          %341 = sbr.rel (%p339) target = $region64
        $region63: #{tpu_custom_call.1} parent=51 // pred_region
          %342 = dma.done [#allocation9], 768
        $region64: #{tpu_custom_call.1} parent=51 // pred_fallthru
          _
        // Predicated region
        $region65: #{tpu_custom_call.1} parent=51 // pred_check
          %p343 = pneg %p179
        $region66: #{tpu_custom_call.1} parent=51 // pred_check_branch
          %345 = sbr.rel (%p343) target = $region68
        $region67: #{tpu_custom_call.1} parent=51 // pred_region
          %346 = dma.done [#allocation12], 3072
        $region68: #{tpu_custom_call.1} parent=51 // pred_fallthru
          _
        %p347 = scmp.lt.s32.totalorder %s27, 1
        %s348 = scalar_select %p347, %s27, 1
        %s349 = smul.addr %s348, 2
        %s350 = smul.addr %s349, 4
        %s351 = scalar_lea.vmem %s0, %s350
        %p352 = pneg %p48
        %p353 = pneg %p45
        %s354 = sand.u32 %s61, 1
        %s355 = scalar_lea.sflag [#allocation6], %s354
        %s356 = sand.u32 %s61, 1
        %s357 = smul.addr %s356, 4
        %s358 = scalar_lea.vmem [#allocation5], %s357
        %p359 = pneg %p74
        %p360 = pneg %p71
        %p361 = pneg %p95
        %p362 = pneg %p92
        %p363 = pneg %p116
        %p364 = pneg %p113
        %p365 = pneg %p137
        %p366 = pneg %p134
        %p367 = pneg %p158
        %p368 = pneg %p155
        %p369 = pneg %p179
        %p370 = pneg %p176
        %p371 = pneg %p200
        %p372 = pneg %p197
        %p373 = pneg %p226
        %p374 = pneg %p223
        %s375 = sand.u32 %s213, 1
        %s376 = scalar_lea.sflag [#allocation7], %s375
        %s377 = sand.u32 %s213, 1
        %s378 = smul.addr %s377, 16
        %s379 = scalar_lea.vmem [#allocation13], %s378
        %p380 = scmp.lt.s32.totalorder %s27, 1
        %s381 = scalar_select %p380, %s27, 1
        %s382 = smul.addr %s381, 2
        %s383 = smul.addr %s382, 4
        %s384 = scalar_lea.vmem %s0, %s383
        %vm386 = vcmask 516096
        %vm387 = vsmask.f32 256
        %vm388 = vmand %vm386, %vm387
        %v389 = vld [vmem:[#allocation2] sm:$0x1]
        %v390 = vsel %vm388, 0, %v389
        %391 = vst [vmem:[#allocation2] sm:$0x1] %v390
        %vm392 = vsmask.f32 7938
        %vm393 = vmand %vm386, %vm392
        %v394 = vld [vmem:[#allocation2 + $0x8] sm:$0x1]
        %v395 = vsel %vm393, 0, %v394
        %396 = vst [vmem:[#allocation2 + $0x8] sm:$0x1] %v395
        %vm397 = vcmask 1040384
        %vm398 = vmand %vm397, %vm387
        %v399 = vld [vmem:[#allocation4] sm:$0x1]
        %v400 = vsel %vm398, 0, %v399
        %401 = vst [vmem:[#allocation4] sm:$0x1] %v400
        %vm402 = vmand %vm397, %vm392
        %v403 = vld [vmem:[#allocation4 + $0x8] sm:$0x1]
        %v404 = vsel %vm402, 0, %v403
        %405 = vst [vmem:[#allocation4 + $0x8] sm:$0x1] %v404
        %v406 = vld [vmem:[%s384] sm:$0xf]
        %v407 = vld [vmem:[%s384 + $0x4] sm:$0xf]
        %vm408 = vsmask.f32 4368
        %vm409 = vmor %vm387, %vm408
        %v411 = vshrl.u32 %v406, 16
        %v413 = vrot.slane %v411, 7
        %v414 = vshll.u32 %v406, 16
        %v416 = vor.u32 %v413, %v414
        %v417 = vrot.slane %v413, 4
        %v419 = vshrl.u32 %v407, 16
        %v421 = vrot.slane %v419, 7
        %v422 = vshll.u32 %v407, 16
        %v424 = vor.u32 %v421, %v422
        %v425 = vsel %vm409, %v417, %v424
        %v426 = vrot.slane %v421, 4
        %vm430 = vcmask 519168
        %vm431 = vmand %vm430, %vm392
        %v432 = vld [vmem:[#allocation2] sm:$0xf]
        %v433 = vsel %vm431, %v416, %v432
        %434 = vst [vmem:[#allocation2] sm:$0xf] %v433
        %vm435 = vcmask 519168
        %436 = vst.msk [vmem:[#allocation2 + $0x4] sm:$0xf] %vm435, %v425
        %v437 = vld [vmem:[#allocation2 + $0x8] sm:$0x1]
        %v438 = vsel %vm388, %v426, %v437
        %439 = vst [vmem:[#allocation2 + $0x8] sm:$0x1] %v438
        %v440 = vld [vmem:[%s2] sm:$0xf]
        %v441 = vld [vmem:[%s2 + $0x4] sm:$0xf]
        %v442 = vld [vmem:[%s2 + $0x8] sm:$0x1]
        %v443 = vld [vmem:[%s330] sm:$0xf]
        %v447 = vunpack.c.l.b16 %v440
        %v448 = vunpack.c.l.b16 %v441
        %v449 = vunpack.c.l.b16 %v442
        %v450 = vpack.c.b16 %v448, %v447
        %v451 = vpack.c.b16 %v449, %v449
        %vm452 = vcmask 64512
        %v454 = vsel %vm452, %v450, 0
        %v457 = vsel %vm452, %v451, 0
        %vm459 = vcmask 1043456
        %v461 = vsel %vm459, %v443, 0
        %463 = vmatprep.subr.bf16.mxu0 0
        %464 = vmatpush1.bf16.msra.mxu0 0
        %465 = vmatprep.subr.bf16.mxu0 0
        %466 = vmatpush1.bf16.msra.mxu0 0
        %467 = vmatprep.subr.bf16.mxu0 0
        %468 = vmatpush1.bf16.msra.mxu0 0
        %469 = vmatprep.subr.bf16.mxu0 0
        %470 = vmatpush1.bf16.msra.mxu0 0
        %471 = vmatprep.subr.bf16.mxu0 0
        %472 = vmatpush1.bf16.msra.mxu0 0
        %473 = vmatprep.subr.bf16.mxu0 0
        %474 = vmatpush1.bf16.msra.mxu0 0
        %475 = vmatprep.subr.bf16.mxu0 0
        %476 = vmatpush1.bf16.msra.mxu0 0
        %477 = vmatprep.subr.bf16.mxu0 0
        %478 = vmatpush1.bf16.msra.mxu0 %v461
        %479 = vmatprep.subr.bf16.mxu0 0
        %480 = vmatpush2.bf16.msra.mxu0 0
        %481 = vmatprep.subr.bf16.mxu0 0
        %482 = vmatpush2.bf16.msra.mxu0 0
        %483 = vmatprep.subr.bf16.mxu0 0
        %484 = vmatpush2.bf16.msra.mxu0 0
        %485 = vmatprep.subr.bf16.mxu0 0
        %486 = vmatpush2.bf16.msra.mxu0 0
        %487 = vmatprep.subr.bf16.mxu0 0
        %488 = vmatpush2.bf16.msra.mxu0 0
        %489 = vmatprep.subr.bf16.mxu0 0
        %490 = vmatpush2.bf16.msra.mxu0 0
        %491 = vmatprep.subr.bf16.mxu0 0
        %492 = vmatpush2.bf16.msra.mxu0 0
        %493 = vmatprep.subr.bf16.mxu0 0
        %494 = vmatpush2.bf16.msra.mxu0 0
        %495 = vmatprep.mubr.bf16.mxu0 0
        %496 = vmatmul.mubr.bf16.gmra.mxu0 %v454
        %v497 = vpop.f32.mrf.mxu0
        %v498 = vadd.f32 0.0, %v497
        %v499 = vpop.f32.mrf.mxu0
        %v500 = vpop.f32.mrf.mxu0
        %v501 = vadd.f32 0.0, %v500
        %v502 = vpop.f32.mrf.mxu0
        %503 = vmatprep.mubr.bf16.mxu0 0
        %504 = vmatmul.mubr.bf16.gmra.mxu0 %v457
        %v505 = vpop.f32.mrf.mxu0
        %v506 = vadd.f32 0.0, %v505
        %v507 = vpop.f32.mrf.mxu0
        %v508 = vpop.f32.mrf.mxu0
        %v509 = vpop.f32.mrf.mxu0
        %510 = vdwg.mxu0
        %v511 = vpack.c.bf16 %v501, %v498
        %v512 = vpack.c.bf16 %v506, %v506
        %v515 = vunpack.c.l.b16 %v511
        %v516 = vunpack.c.h.b16 %v511
        %v517 = vunpack.c.l.b16 %v512
        %v518 = vpack.c.b16 %v515, %v515
        %v519 = vpack.c.b16 %v516, %v516
        %v520 = vpack.c.b16 %v517, %v517
        %vm524 = vcmask 257024
        %525 = vst.msk [vmem:[#allocation3] sm:$0xf] %vm524, %v518
        %526 = vst.msk [vmem:[#allocation3 + $0x4] sm:$0xf] %vm524, %v519
        %vm527 = vcmask 253952
        %528 = vst.msk [vmem:[#allocation3 + $0x8] sm:$0x1] %vm527, %v520
        %v529 = vld [vmem:[#allocation2] sm:$0xf]
        %v530 = vld [vmem:[#allocation2 + $0x4] sm:$0xf]
        %v531 = vld [vmem:[#allocation3] sm:$0xf]
        %v532 = vld [vmem:[#allocation3 + $0x4] sm:$0xf]
        %v533 = vld [vmem:[#allocation8] sm:$0xf]
        %v534 = vld [vmem:[#allocation8 + $0x4] sm:$0xf]
        %v535 = vld [vmem:[#allocation8 + $0x8] sm:$0xf]
        %v536 = vld [vmem:[#allocation8 + $0xc] sm:$0xf]
        %v537 = vld [vmem:[#allocation8 + $0x10] sm:$0xf]
        %v538 = vld [vmem:[#allocation8 + $0x14] sm:$0xf]
        %v539 = vld [vmem:[#allocation8 + $0x18] sm:$0xf]
        %v540 = vld [vmem:[#allocation8 + $0x1c] sm:$0xf]
        %v541 = vld [vmem:[#allocation10] sm:$0xf]
        %v542 = vld [vmem:[#allocation10 + $0x4] sm:$0xf]
        %v543 = vld [vmem:[#allocation10 + $0x8] sm:$0xf]
        %v544 = vld [vmem:[#allocation10 + $0xc] sm:$0xf]
        %v547 = vunpack.c.l.b16 %v531
        %v548 = vunpack.c.l.b16 %v532
        %v549 = vpack.c.b16 %v548, %v547
        %v554 = vunpack.c.l.b16 %v541
        %v555 = vunpack.c.l.b16 %v542
        %v556 = vunpack.c.l.b16 %v543
        %v557 = vunpack.c.l.b16 %v544
        %v558 = vpack.c.b16 %v555, %v554
        %v559 = vpack.c.b16 %v557, %v556
        %vm562 = vcmask 261120
        %v564 = vsel %vm562, %v549, 0
        %566 = vmatprep.subr.bf16.mxu0 0
        %567 = vmatpush1.bf16.msra.mxu0 0
        %568 = vmatprep.subr.bf16.mxu0 0
        %569 = vmatpush1.bf16.msra.mxu0 0
        %570 = vmatprep.subr.bf16.mxu0 0
        %571 = vmatpush1.bf16.msra.mxu0 0
        %572 = vmatprep.subr.bf16.mxu0 0
        %573 = vmatpush1.bf16.msra.mxu0 0
        %574 = vmatprep.subr.bf16.mxu0 0
        %575 = vmatpush1.bf16.msra.mxu0 0
        %576 = vmatprep.subr.bf16.mxu0 0
        %577 = vmatpush1.bf16.msra.mxu0 0
        %578 = vmatprep.subr.bf16.mxu0 0
        %579 = vmatpush1.bf16.msra.mxu0 %v559
        %580 = vmatprep.subr.bf16.mxu0 0
        %581 = vmatpush1.bf16.msra.mxu0 %v558
        %582 = vmatprep.subr.bf16.mxu0 0
        %583 = vmatpush2.bf16.msra.mxu0 0
        %584 = vmatprep.subr.bf16.mxu0 0
        %585 = vmatpush2.bf16.msra.mxu0 0
        %586 = vmatprep.subr.bf16.mxu0 0
        %587 = vmatpush2.bf16.msra.mxu0 0
        %588 = vmatprep.subr.bf16.mxu0 0
        %589 = vmatpush2.bf16.msra.mxu0 0
        %590 = vmatprep.subr.bf16.mxu0 0
        %591 = vmatpush2.bf16.msra.mxu0 0
        %592 = vmatprep.subr.bf16.mxu0 0
        %593 = vmatpush2.bf16.msra.mxu0 0
        %594 = vmatprep.subr.bf16.mxu0 0
        %595 = vmatpush2.bf16.msra.mxu0 0
        %596 = vmatprep.subr.bf16.mxu0 0
        %597 = vmatpush2.bf16.msra.mxu0 0
        %598 = vmatprep.mubr.bf16.mxu0 0
        %599 = vmatmul.mubr.bf16.gmra.mxu0 %v564
        %v600 = vpop.f32.mrf.mxu0
        %v601 = vadd.f32 0.0, %v600
        %v602 = vpop.f32.mrf.mxu0
        %v603 = vpop.f32.mrf.mxu0
        %v604 = vadd.f32 0.0, %v603
        %v605 = vpop.f32.mrf.mxu0
        %606 = vdwg.mxu0
        %v609 = vunpack.c.l.b16 %v529
        %v610 = vunpack.c.l.b16 %v530
        %v611 = vpack.c.b16 %v610, %v609
        %v620 = vunpack.c.l.b16 %v533
        %v621 = vunpack.c.l.b16 %v534
        %v622 = vunpack.c.l.b16 %v535
        %v623 = vunpack.c.l.b16 %v536
        %v624 = vunpack.c.l.b16 %v537
        %v625 = vunpack.c.l.b16 %v538
        %v626 = vunpack.c.l.b16 %v539
        %v627 = vunpack.c.l.b16 %v540
        %v628 = vpack.c.b16 %v621, %v620
        %v629 = vpack.c.b16 %v623, %v622
        %v630 = vpack.c.b16 %v625, %v624
        %v631 = vpack.c.b16 %v627, %v626
        %vm636 = vcmask 523264
        %v638 = vsel %vm636, %v611, 0
        %640 = vmatprep.subr.bf16.mxu0 0
        %641 = vmatpush1.bf16.msra.mxu0 0
        %642 = vmatprep.subr.bf16.mxu0 0
        %643 = vmatpush1.bf16.msra.mxu0 0
        %644 = vmatprep.subr.bf16.mxu0 0
        %645 = vmatpush1.bf16.msra.mxu0 0
        %646 = vmatprep.subr.bf16.mxu0 0
        %647 = vmatpush1.bf16.msra.mxu0 0
        %648 = vmatprep.subr.bf16.mxu0 0
        %649 = vmatpush1.bf16.msra.mxu0 %v631
        %650 = vmatprep.subr.bf16.mxu0 0
        %651 = vmatpush1.bf16.msra.mxu0 %v630
        %652 = vmatprep.subr.bf16.mxu0 0
        %653 = vmatpush1.bf16.msra.mxu0 %v629
        %654 = vmatprep.subr.bf16.mxu0 0
        %655 = vmatpush1.bf16.msra.mxu0 %v628
        %656 = vmatprep.subr.bf16.mxu0 0
        %657 = vmatpush2.bf16.msra.mxu0 0
        %658 = vmatprep.subr.bf16.mxu0 0
        %659 = vmatpush2.bf16.msra.mxu0 0
        %660 = vmatprep.subr.bf16.mxu0 0
        %661 = vmatpush2.bf16.msra.mxu0 0
        %662 = vmatprep.subr.bf16.mxu0 0
        %663 = vmatpush2.bf16.msra.mxu0 0
        %664 = vmatprep.subr.bf16.mxu0 0
        %665 = vmatpush2.bf16.msra.mxu0 0
        %666 = vmatprep.subr.bf16.mxu0 0
        %667 = vmatpush2.bf16.msra.mxu0 0
        %668 = vmatprep.subr.bf16.mxu0 0
        %669 = vmatpush2.bf16.msra.mxu0 0
        %670 = vmatprep.subr.bf16.mxu0 0
        %671 = vmatpush2.bf16.msra.mxu0 0
        %672 = vmatprep.mubr.bf16.mxu0 0
        %673 = vmatmul.mubr.bf16.gmra.mxu0 %v638
        %v674 = vpop.f32.mrf.mxu0
        %v675 = vadd.f32 %v601, %v674
        %v676 = vpop.f32.mrf.mxu0
        %v677 = vpop.f32.mrf.mxu0
        %v678 = vadd.f32 %v604, %v677
        %v679 = vpop.f32.mrf.mxu0
        %680 = vdwg.mxu0
        %v681 = vld [vmem:[#allocation2] sm:$0xf]
        %v682 = vld [vmem:[#allocation2 + $0x4] sm:$0xf]
        %v683 = vld [vmem:[#allocation2 + $0x8] sm:$0x1]
        %v684 = vld [vmem:[#allocation3] sm:$0xf]
        %v685 = vld [vmem:[#allocation3 + $0x4] sm:$0xf]
        %v686 = vld [vmem:[#allocation3 + $0x8] sm:$0x1]
        %s687 = scalar_lea.vmem [#allocation8], 32
        %v688 = vld [vmem:[%s687] sm:$0xf]
        %v689 = vld [vmem:[%s687 + $0x4] sm:$0xf]
        %v690 = vld [vmem:[%s687 + $0x8] sm:$0xf]
        %v691 = vld [vmem:[%s687 + $0xc] sm:$0xf]
        %v692 = vld [vmem:[%s687 + $0x10] sm:$0xf]
        %v693 = vld [vmem:[%s687 + $0x14] sm:$0xf]
        %v694 = vld [vmem:[%s687 + $0x18] sm:$0xf]
        %v695 = vld [vmem:[%s687 + $0x1c] sm:$0xf]
        %v699 = vunpack.c.l.b16 %v681
        %v700 = vunpack.c.l.b16 %v682
        %v701 = vunpack.c.l.b16 %v683
        %v702 = vpack.c.b16 %v700, %v699
        %v703 = vpack.c.b16 %v701, %v701
        %vm704 = vsmask.f32 7424
        %v706 = vshrl.u32 %v702, 16
        %v708 = vshll.u32 %v702, 16
        %v710 = vrot.slane %v708, 1
        %v711 = vor.u32 %v706, %v710
        %v713 = vshll.u32 %v703, 16
        %v715 = vrot.slane %v713, 1
        %v716 = vsel %vm704, %v711, %v715
        %v725 = vunpack.c.l.b16 %v688
        %v726 = vunpack.c.l.b16 %v689
        %v727 = vunpack.c.l.b16 %v690
        %v728 = vunpack.c.l.b16 %v691
        %v729 = vunpack.c.l.b16 %v692
        %v730 = vunpack.c.l.b16 %v693
        %v731 = vunpack.c.l.b16 %v694
        %v732 = vunpack.c.l.b16 %v695
        %v733 = vpack.c.b16 %v726, %v725
        %v734 = vpack.c.b16 %v728, %v727
        %v735 = vpack.c.b16 %v730, %v729
        %v736 = vpack.c.b16 %v732, %v731
        %v742 = vsel %vm636, %v716, 0
        %744 = vmatprep.subr.bf16.mxu0 0
        %745 = vmatpush1.bf16.msra.mxu0 0
        %746 = vmatprep.subr.bf16.mxu0 0
        %747 = vmatpush1.bf16.msra.mxu0 0
        %748 = vmatprep.subr.bf16.mxu0 0
        %749 = vmatpush1.bf16.msra.mxu0 0
        %750 = vmatprep.subr.bf16.mxu0 0
        %751 = vmatpush1.bf16.msra.mxu0 0
        %752 = vmatprep.subr.bf16.mxu0 0
        %753 = vmatpush1.bf16.msra.mxu0 %v736
        %754 = vmatprep.subr.bf16.mxu0 0
        %755 = vmatpush1.bf16.msra.mxu0 %v735
        %756 = vmatprep.subr.bf16.mxu0 0
        %757 = vmatpush1.bf16.msra.mxu0 %v734
        %758 = vmatprep.subr.bf16.mxu0 0
        %759 = vmatpush1.bf16.msra.mxu0 %v733
        %760 = vmatprep.subr.bf16.mxu0 0
        %761 = vmatpush2.bf16.msra.mxu0 0
        %762 = vmatprep.subr.bf16.mxu0 0
        %763 = vmatpush2.bf16.msra.mxu0 0
        %764 = vmatprep.subr.bf16.mxu0 0
        %765 = vmatpush2.bf16.msra.mxu0 0
        %766 = vmatprep.subr.bf16.mxu0 0
        %767 = vmatpush2.bf16.msra.mxu0 0
        %768 = vmatprep.subr.bf16.mxu0 0
        %769 = vmatpush2.bf16.msra.mxu0 0
        %770 = vmatprep.subr.bf16.mxu0 0
        %771 = vmatpush2.bf16.msra.mxu0 0
        %772 = vmatprep.subr.bf16.mxu0 0
        %773 = vmatpush2.bf16.msra.mxu0 0
        %774 = vmatprep.subr.bf16.mxu0 0
        %775 = vmatpush2.bf16.msra.mxu0 0
        %776 = vmatprep.mubr.bf16.mxu0 0
        %777 = vmatmul.mubr.bf16.gmra.mxu0 %v742
        %v778 = vpop.f32.mrf.mxu0
        %v779 = vadd.f32 0.0, %v778
        %v780 = vpop.f32.mrf.mxu0
        %v781 = vpop.f32.mrf.mxu0
        %v782 = vadd.f32 0.0, %v781
        %v783 = vpop.f32.mrf.mxu0
        %784 = vdwg.mxu0
        %v785 = vadd.f32 %v675, %v779
        %v786 = vadd.f32 %v678, %v782
        %s787 = scalar_lea.vmem [#allocation10], 16
        %v788 = vld [vmem:[%s787] sm:$0xf]
        %v789 = vld [vmem:[%s787 + $0x4] sm:$0xf]
        %v790 = vld [vmem:[%s787 + $0x8] sm:$0xf]
        %v791 = vld [vmem:[%s787 + $0xc] sm:$0xf]
        %v795 = vunpack.c.l.b16 %v684
        %v796 = vunpack.c.l.b16 %v685
        %v797 = vunpack.c.l.b16 %v686
        %v798 = vpack.c.b16 %v796, %v795
        %v799 = vpack.c.b16 %v797, %v797
        %v801 = vshrl.u32 %v798, 16
        %v803 = vshll.u32 %v798, 16
        %v805 = vrot.slane %v803, 1
        %v806 = vor.u32 %v801, %v805
        %v808 = vshll.u32 %v799, 16
        %v810 = vrot.slane %v808, 1
        %v811 = vsel %vm704, %v806, %v810
        %v816 = vunpack.c.l.b16 %v788
        %v817 = vunpack.c.l.b16 %v789
        %v818 = vunpack.c.l.b16 %v790
        %v819 = vunpack.c.l.b16 %v791
        %v820 = vpack.c.b16 %v817, %v816
        %v821 = vpack.c.b16 %v819, %v818
        %v825 = vsel %vm562, %v811, 0
        %827 = vmatprep.subr.bf16.mxu0 0
        %828 = vmatpush1.bf16.msra.mxu0 0
        %829 = vmatprep.subr.bf16.mxu0 0
        %830 = vmatpush1.bf16.msra.mxu0 0
        %831 = vmatprep.subr.bf16.mxu0 0
        %832 = vmatpush1.bf16.msra.mxu0 0
        %833 = vmatprep.subr.bf16.mxu0 0
        %834 = vmatpush1.bf16.msra.mxu0 0
        %835 = vmatprep.subr.bf16.mxu0 0
        %836 = vmatpush1.bf16.msra.mxu0 0
        %837 = vmatprep.subr.bf16.mxu0 0
        %838 = vmatpush1.bf16.msra.mxu0 0
        %839 = vmatprep.subr.bf16.mxu0 0
        %840 = vmatpush1.bf16.msra.mxu0 %v821
        %841 = vmatprep.subr.bf16.mxu0 0
        %842 = vmatpush1.bf16.msra.mxu0 %v820
        %843 = vmatprep.subr.bf16.mxu0 0
        %844 = vmatpush2.bf16.msra.mxu0 0
        %845 = vmatprep.subr.bf16.mxu0 0
        %846 = vmatpush2.bf16.msra.mxu0 0
        %847 = vmatprep.subr.bf16.mxu0 0
        %848 = vmatpush2.bf16.msra.mxu0 0
        %849 = vmatprep.subr.bf16.mxu0 0
        %850 = vmatpush2.bf16.msra.mxu0 0
        %851 = vmatprep.subr.bf16.mxu0 0
        %852 = vmatpush2.bf16.msra.mxu0 0
        %853 = vmatprep.subr.bf16.mxu0 0
        %854 = vmatpush2.bf16.msra.mxu0 0
        %855 = vmatprep.subr.bf16.mxu0 0
        %856 = vmatpush2.bf16.msra.mxu0 0
        %857 = vmatprep.subr.bf16.mxu0 0
        %858 = vmatpush2.bf16.msra.mxu0 0
        %859 = vmatprep.mubr.bf16.mxu0 0
        %860 = vmatmul.mubr.bf16.gmra.mxu0 %v825
        %v861 = vpop.f32.mrf.mxu0
        %v862 = vadd.f32 0.0, %v861
        %v863 = vpop.f32.mrf.mxu0
        %v864 = vpop.f32.mrf.mxu0
        %v865 = vadd.f32 0.0, %v864
        %v866 = vpop.f32.mrf.mxu0
        %867 = vdwg.mxu0
        %v868 = vadd.f32 %v785, %v862
        %v869 = vadd.f32 %v786, %v865
        %v870 = vld [vmem:[#allocation2] sm:$0xe]
        %v871 = vld [vmem:[#allocation3] sm:$0xe]
        %s872 = scalar_lea.vmem [#allocation8], 64
        %v873 = vld [vmem:[%s872] sm:$0xf]
        %v874 = vld [vmem:[%s872 + $0x4] sm:$0xf]
        %v875 = vld [vmem:[%s872 + $0x8] sm:$0xf]
        %v876 = vld [vmem:[%s872 + $0xc] sm:$0xf]
        %v877 = vld [vmem:[%s872 + $0x10] sm:$0xf]
        %v878 = vld [vmem:[%s872 + $0x14] sm:$0xf]
        %v879 = vld [vmem:[%s872 + $0x18] sm:$0xf]
        %v880 = vld [vmem:[%s872 + $0x1c] sm:$0xf]
        %v882 = vunpack.c.l.b16 %v870
        %v883 = vpack.c.b16 %v700, %v882
        %vm884 = vcmask 1046528
        %v885 = vrot.slane %v883, 1
        %v886 = vrot.slane %v703, 1
        %v887 = vsel %vm884, %v885, %v886
        %v896 = vunpack.c.l.b16 %v873
        %v897 = vunpack.c.l.b16 %v874
        %v898 = vunpack.c.l.b16 %v875
        %v899 = vunpack.c.l.b16 %v876
        %v900 = vunpack.c.l.b16 %v877
        %v901 = vunpack.c.l.b16 %v878
        %v902 = vunpack.c.l.b16 %v879
        %v903 = vunpack.c.l.b16 %v880
        %v904 = vpack.c.b16 %v897, %v896
        %v905 = vpack.c.b16 %v899, %v898
        %v906 = vpack.c.b16 %v901, %v900
        %v907 = vpack.c.b16 %v903, %v902
        %v913 = vsel %vm636, %v887, 0
        %915 = vmatprep.subr.bf16.mxu0 0
        %916 = vmatpush1.bf16.msra.mxu0 0
        %917 = vmatprep.subr.bf16.mxu0 0
        %918 = vmatpush1.bf16.msra.mxu0 0
        %919 = vmatprep.subr.bf16.mxu0 0
        %920 = vmatpush1.bf16.msra.mxu0 0
        %921 = vmatprep.subr.bf16.mxu0 0
        %922 = vmatpush1.bf16.msra.mxu0 0
        %923 = vmatprep.subr.bf16.mxu0 0
        %924 = vmatpush1.bf16.msra.mxu0 %v907
        %925 = vmatprep.subr.bf16.mxu0 0
        %926 = vmatpush1.bf16.msra.mxu0 %v906
        %927 = vmatprep.subr.bf16.mxu0 0
        %928 = vmatpush1.bf16.msra.mxu0 %v905
        %929 = vmatprep.subr.bf16.mxu0 0
        %930 = vmatpush1.bf16.msra.mxu0 %v904
        %931 = vmatprep.subr.bf16.mxu0 0
        %932 = vmatpush2.bf16.msra.mxu0 0
        %933 = vmatprep.subr.bf16.mxu0 0
        %934 = vmatpush2.bf16.msra.mxu0 0
        %935 = vmatprep.subr.bf16.mxu0 0
        %936 = vmatpush2.bf16.msra.mxu0 0
        %937 = vmatprep.subr.bf16.mxu0 0
        %938 = vmatpush2.bf16.msra.mxu0 0
        %939 = vmatprep.subr.bf16.mxu0 0
        %940 = vmatpush2.bf16.msra.mxu0 0
        %941 = vmatprep.subr.bf16.mxu0 0
        %942 = vmatpush2.bf16.msra.mxu0 0
        %943 = vmatprep.subr.bf16.mxu0 0
        %944 = vmatpush2.bf16.msra.mxu0 0
        %945 = vmatprep.subr.bf16.mxu0 0
        %946 = vmatpush2.bf16.msra.mxu0 0
        %947 = vmatprep.mubr.bf16.mxu0 0
        %948 = vmatmul.mubr.bf16.gmra.mxu0 %v913
        %v949 = vpop.f32.mrf.mxu0
        %v950 = vadd.f32 0.0, %v949
        %v951 = vpop.f32.mrf.mxu0
        %v952 = vpop.f32.mrf.mxu0
        %v953 = vadd.f32 0.0, %v952
        %v954 = vpop.f32.mrf.mxu0
        %955 = vdwg.mxu0
        %v956 = vadd.f32 %v868, %v950
        %v957 = vadd.f32 %v869, %v953
        %s958 = scalar_lea.vmem [#allocation10], 32
        %v959 = vld [vmem:[%s958] sm:$0xf]
        %v960 = vld [vmem:[%s958 + $0x4] sm:$0xf]
        %v961 = vld [vmem:[%s958 + $0x8] sm:$0xf]
        %v962 = vld [vmem:[%s958 + $0xc] sm:$0xf]
        %v964 = vunpack.c.l.b16 %v871
        %v965 = vpack.c.b16 %v796, %v964
        %v966 = vrot.slane %v965, 1
        %v967 = vrot.slane %v799, 1
        %v968 = vsel %vm884, %v966, %v967
        %v973 = vunpack.c.l.b16 %v959
        %v974 = vunpack.c.l.b16 %v960
        %v975 = vunpack.c.l.b16 %v961
        %v976 = vunpack.c.l.b16 %v962
        %v977 = vpack.c.b16 %v974, %v973
        %v978 = vpack.c.b16 %v976, %v975
        %v982 = vsel %vm562, %v968, 0
        %984 = vmatprep.subr.bf16.mxu0 0
        %985 = vmatpush1.bf16.msra.mxu0 0
        %986 = vmatprep.subr.bf16.mxu0 0
        %987 = vmatpush1.bf16.msra.mxu0 0
        %988 = vmatprep.subr.bf16.mxu0 0
        %989 = vmatpush1.bf16.msra.mxu0 0
        %990 = vmatprep.subr.bf16.mxu0 0
        %991 = vmatpush1.bf16.msra.mxu0 0
        %992 = vmatprep.subr.bf16.mxu0 0
        %993 = vmatpush1.bf16.msra.mxu0 0
        %994 = vmatprep.subr.bf16.mxu0 0
        %995 = vmatpush1.bf16.msra.mxu0 0
        %996 = vmatprep.subr.bf16.mxu0 0
        %997 = vmatpush1.bf16.msra.mxu0 %v978
        %998 = vmatprep.subr.bf16.mxu0 0
        %999 = vmatpush1.bf16.msra.mxu0 %v977
        %1000 = vmatprep.subr.bf16.mxu0 0
        %1001 = vmatpush2.bf16.msra.mxu0 0
        %1002 = vmatprep.subr.bf16.mxu0 0
        %1003 = vmatpush2.bf16.msra.mxu0 0
        %1004 = vmatprep.subr.bf16.mxu0 0
        %1005 = vmatpush2.bf16.msra.mxu0 0
        %1006 = vmatprep.subr.bf16.mxu0 0
        %1007 = vmatpush2.bf16.msra.mxu0 0
        %1008 = vmatprep.subr.bf16.mxu0 0
        %1009 = vmatpush2.bf16.msra.mxu0 0
        %1010 = vmatprep.subr.bf16.mxu0 0
        %1011 = vmatpush2.bf16.msra.mxu0 0
        %1012 = vmatprep.subr.bf16.mxu0 0
        %1013 = vmatpush2.bf16.msra.mxu0 0
        %1014 = vmatprep.subr.bf16.mxu0 0
        %1015 = vmatpush2.bf16.msra.mxu0 0
        %1016 = vmatprep.mubr.bf16.mxu0 0
        %1017 = vmatmul.mubr.bf16.gmra.mxu0 %v982
        %v1018 = vpop.f32.mrf.mxu0
        %v1019 = vadd.f32 0.0, %v1018
        %v1020 = vpop.f32.mrf.mxu0
        %v1021 = vpop.f32.mrf.mxu0
        %v1022 = vadd.f32 0.0, %v1021
        %v1023 = vpop.f32.mrf.mxu0
        %1024 = vdwg.mxu0
        %v1025 = vadd.f32 %v956, %v1019
        %v1026 = vadd.f32 %v957, %v1022
        %v1027 = vld [vmem:[%s5] sm:$0x1]
        %v1029 = vlaneseq
        %v1030 = vshrl.u32 %v1029, 7
        %v1031 = vsub.s32 0, %v1030
        %v1032 = vrot.slane %v1027, %v1031
        %v1034 = vadd.f32 %v1025, %v1032
        %v1035 = vadd.f32 %v1026, %v1032
        %v1036 = vmax.f32 %v1034, 0.0
        %v1037 = vmax.f32 %v1035, 0.0
        %v1038 = vpack.c.bf16 %v1037, %v1036
        %v1040 = vunpack.c.l.b16 %v1038
        %v1041 = vunpack.c.h.b16 %v1038
        %v1042 = vpack.c.b16 %v1040, %v1040
        %v1043 = vpack.c.b16 %v1041, %v1041
        %v1045 = vshrl.u32 %v1042, 16
        %v1047 = vrot.slane %v1045, 7
        %v1048 = vshll.u32 %v1042, 16
        %v1050 = vor.u32 %v1047, %v1048
        %v1051 = vrot.slane %v1047, 4
        %v1053 = vshrl.u32 %v1043, 16
        %v1055 = vrot.slane %v1053, 7
        %v1056 = vshll.u32 %v1043, 16
        %v1058 = vor.u32 %v1055, %v1056
        %v1059 = vsel %vm409, %v1051, %v1058
        %v1060 = vrot.slane %v1055, 4
        %vm1064 = vcmask 1043456
        %vm1065 = vmand %vm1064, %vm392
        %v1066 = vld [vmem:[#allocation4] sm:$0xf]
        %v1067 = vsel %vm1065, %v1050, %v1066
        %1068 = vst [vmem:[#allocation4] sm:$0xf] %v1067
        %1069 = vst [vmem:[#allocation4 + $0x4] sm:$0xf] %v1059
        %v1070 = vld [vmem:[#allocation4 + $0x8] sm:$0x1]
        %v1071 = vsel %vm398, %v1060, %v1070
        %1072 = vst [vmem:[#allocation4 + $0x8] sm:$0x1] %v1071
        %v1073 = vld [vmem:[#allocation4] sm:$0xf]
        %v1074 = vld [vmem:[#allocation4 + $0x4] sm:$0xf]
        %v1075 = vld [vmem:[#allocation11] sm:$0xf]
        %v1076 = vld [vmem:[#allocation11 + $0x4] sm:$0xf]
        %v1077 = vld [vmem:[#allocation11 + $0x8] sm:$0xf]
        %v1078 = vld [vmem:[#allocation11 + $0xc] sm:$0xf]
        %v1079 = vld [vmem:[#allocation11 + $0x10] sm:$0xf]
        %v1080 = vld [vmem:[#allocation11 + $0x14] sm:$0xf]
        %v1081 = vld [vmem:[#allocation11 + $0x18] sm:$0xf]
        %v1082 = vld [vmem:[#allocation11 + $0x1c] sm:$0xf]
        %v1083 = vld [vmem:[#allocation11 + $0x20] sm:$0xf]
        %v1084 = vld [vmem:[#allocation11 + $0x24] sm:$0xf]
        %v1085 = vld [vmem:[#allocation11 + $0x28] sm:$0xf]
        %v1086 = vld [vmem:[#allocation11 + $0x2c] sm:$0xf]
        %v1087 = vld [vmem:[#allocation11 + $0x30] sm:$0xf]
        %v1088 = vld [vmem:[#allocation11 + $0x34] sm:$0xf]
        %v1089 = vld [vmem:[#allocation11 + $0x38] sm:$0xf]
        %v1090 = vld [vmem:[#allocation11 + $0x3c] sm:$0xf]
        %v1091 = vld [vmem:[#allocation4 + $0x8] sm:$0x1]
        %s1092 = scalar_lea.vmem [#allocation11], 64
        %v1093 = vld [vmem:[%s1092] sm:$0xf]
        %v1094 = vld [vmem:[%s1092 + $0x4] sm:$0xf]
        %v1095 = vld [vmem:[%s1092 + $0x8] sm:$0xf]
        %v1096 = vld [vmem:[%s1092 + $0xc] sm:$0xf]
        %v1097 = vld [vmem:[%s1092 + $0x10] sm:$0xf]
        %v1098 = vld [vmem:[%s1092 + $0x14] sm:$0xf]
        %v1099 = vld [vmem:[%s1092 + $0x18] sm:$0xf]
        %v1100 = vld [vmem:[%s1092 + $0x1c] sm:$0xf]
        %v1101 = vld [vmem:[%s1092 + $0x20] sm:$0xf]
        %v1102 = vld [vmem:[%s1092 + $0x24] sm:$0xf]
        %v1103 = vld [vmem:[%s1092 + $0x28] sm:$0xf]
        %v1104 = vld [vmem:[%s1092 + $0x2c] sm:$0xf]
        %v1105 = vld [vmem:[%s1092 + $0x30] sm:$0xf]
        %v1106 = vld [vmem:[%s1092 + $0x34] sm:$0xf]
        %v1107 = vld [vmem:[%s1092 + $0x38] sm:$0xf]
        %v1108 = vld [vmem:[%s1092 + $0x3c] sm:$0xf]
        %v1112 = vunpack.c.l.b16 %v1073
        %v1113 = vunpack.c.l.b16 %v1074
        %v1114 = vunpack.c.l.b16 %v1091
        %v1115 = vpack.c.b16 %v1113, %v1112
        %v1116 = vpack.c.b16 %v1114, %v1114
        %v1118 = vshrl.u32 %v1115, 16
        %v1120 = vshll.u32 %v1115, 16
        %v1122 = vrot.slane %v1120, 1
        %v1123 = vor.u32 %v1118, %v1122
        %v1125 = vshll.u32 %v1116, 16
        %v1127 = vrot.slane %v1125, 1
        %v1128 = vsel %vm704, %v1123, %v1127
        %v1146 = vunpack.c.l.b16 %v1093
        %v1147 = vunpack.c.l.b16 %v1094
        %v1148 = vunpack.c.l.b16 %v1095
        %v1149 = vunpack.c.l.b16 %v1096
        %v1150 = vunpack.c.l.b16 %v1097
        %v1151 = vunpack.c.l.b16 %v1098
        %v1152 = vunpack.c.l.b16 %v1099
        %v1153 = vunpack.c.l.b16 %v1100
        %v1154 = vunpack.c.l.b16 %v1101
        %v1155 = vunpack.c.l.b16 %v1102
        %v1156 = vunpack.c.l.b16 %v1103
        %v1157 = vunpack.c.l.b16 %v1104
        %v1158 = vunpack.c.l.b16 %v1105
        %v1159 = vunpack.c.l.b16 %v1106
        %v1160 = vunpack.c.l.b16 %v1107
        %v1161 = vunpack.c.l.b16 %v1108
        %v1162 = vpack.c.b16 %v1147, %v1146
        %v1163 = vpack.c.b16 %v1149, %v1148
        %v1164 = vpack.c.b16 %v1151, %v1150
        %v1165 = vpack.c.b16 %v1153, %v1152
        %v1166 = vpack.c.b16 %v1155, %v1154
        %v1167 = vpack.c.b16 %v1157, %v1156
        %v1168 = vpack.c.b16 %v1159, %v1158
        %v1169 = vpack.c.b16 %v1161, %v1160
        %1178 = vmatprep.subr.bf16.mxu0 0
        %1179 = vmatpush1.bf16.msra.mxu0 %v1169
        %1180 = vmatprep.subr.bf16.mxu0 0
        %1181 = vmatpush1.bf16.msra.mxu0 %v1168
        %1182 = vmatprep.subr.bf16.mxu0 0
        %1183 = vmatpush1.bf16.msra.mxu0 %v1167
        %1184 = vmatprep.subr.bf16.mxu0 0
        %1185 = vmatpush1.bf16.msra.mxu0 %v1166
        %1186 = vmatprep.subr.bf16.mxu0 0
        %1187 = vmatpush1.bf16.msra.mxu0 %v1165
        %1188 = vmatprep.subr.bf16.mxu0 0
        %1189 = vmatpush1.bf16.msra.mxu0 %v1164
        %1190 = vmatprep.subr.bf16.mxu0 0
        %1191 = vmatpush1.bf16.msra.mxu0 %v1163
        %1192 = vmatprep.subr.bf16.mxu0 0
        %1193 = vmatpush1.bf16.msra.mxu0 %v1162
        %1194 = vmatprep.subr.bf16.mxu0 0
        %1195 = vmatpush2.bf16.msra.mxu0 0
        %1196 = vmatprep.subr.bf16.mxu0 0
        %1197 = vmatpush2.bf16.msra.mxu0 0
        %1198 = vmatprep.subr.bf16.mxu0 0
        %1199 = vmatpush2.bf16.msra.mxu0 0
        %1200 = vmatprep.subr.bf16.mxu0 0
        %1201 = vmatpush2.bf16.msra.mxu0 0
        %1202 = vmatprep.subr.bf16.mxu0 0
        %1203 = vmatpush2.bf16.msra.mxu0 0
        %1204 = vmatprep.subr.bf16.mxu0 0
        %1205 = vmatpush2.bf16.msra.mxu0 0
        %1206 = vmatprep.subr.bf16.mxu0 0
        %1207 = vmatpush2.bf16.msra.mxu0 0
        %1208 = vmatprep.subr.bf16.mxu0 0
        %1209 = vmatpush2.bf16.msra.mxu0 0
        %1210 = vmatprep.mubr.bf16.mxu0 0
        %1211 = vmatmul.mubr.bf16.gmra.mxu0 %v1128
        %v1212 = vpop.f32.mrf.mxu0
        %v1213 = vadd.f32 0.0, %v1212
        %v1214 = vpop.f32.mrf.mxu0
        %v1215 = vpop.f32.mrf.mxu0
        %v1216 = vadd.f32 0.0, %v1215
        %v1217 = vpop.f32.mrf.mxu0
        %1218 = vdwg.mxu0
        %v1236 = vunpack.c.l.b16 %v1075
        %v1237 = vunpack.c.l.b16 %v1076
        %v1238 = vunpack.c.l.b16 %v1077
        %v1239 = vunpack.c.l.b16 %v1078
        %v1240 = vunpack.c.l.b16 %v1079
        %v1241 = vunpack.c.l.b16 %v1080
        %v1242 = vunpack.c.l.b16 %v1081
        %v1243 = vunpack.c.l.b16 %v1082
        %v1244 = vunpack.c.l.b16 %v1083
        %v1245 = vunpack.c.l.b16 %v1084
        %v1246 = vunpack.c.l.b16 %v1085
        %v1247 = vunpack.c.l.b16 %v1086
        %v1248 = vunpack.c.l.b16 %v1087
        %v1249 = vunpack.c.l.b16 %v1088
        %v1250 = vunpack.c.l.b16 %v1089
        %v1251 = vunpack.c.l.b16 %v1090
        %v1252 = vpack.c.b16 %v1237, %v1236
        %v1253 = vpack.c.b16 %v1239, %v1238
        %v1254 = vpack.c.b16 %v1241, %v1240
        %v1255 = vpack.c.b16 %v1243, %v1242
        %v1256 = vpack.c.b16 %v1245, %v1244
        %v1257 = vpack.c.b16 %v1247, %v1246
        %v1258 = vpack.c.b16 %v1249, %v1248
        %v1259 = vpack.c.b16 %v1251, %v1250
        %1268 = vmatprep.subr.bf16.mxu0 0
        %1269 = vmatpush1.bf16.msra.mxu0 %v1259
        %1270 = vmatprep.subr.bf16.mxu0 0
        %1271 = vmatpush1.bf16.msra.mxu0 %v1258
        %1272 = vmatprep.subr.bf16.mxu0 0
        %1273 = vmatpush1.bf16.msra.mxu0 %v1257
        %1274 = vmatprep.subr.bf16.mxu0 0
        %1275 = vmatpush1.bf16.msra.mxu0 %v1256
        %1276 = vmatprep.subr.bf16.mxu0 0
        %1277 = vmatpush1.bf16.msra.mxu0 %v1255
        %1278 = vmatprep.subr.bf16.mxu0 0
        %1279 = vmatpush1.bf16.msra.mxu0 %v1254
        %1280 = vmatprep.subr.bf16.mxu0 0
        %1281 = vmatpush1.bf16.msra.mxu0 %v1253
        %1282 = vmatprep.subr.bf16.mxu0 0
        %1283 = vmatpush1.bf16.msra.mxu0 %v1252
        %1284 = vmatprep.subr.bf16.mxu0 0
        %1285 = vmatpush2.bf16.msra.mxu0 0
        %1286 = vmatprep.subr.bf16.mxu0 0
        %1287 = vmatpush2.bf16.msra.mxu0 0
        %1288 = vmatprep.subr.bf16.mxu0 0
        %1289 = vmatpush2.bf16.msra.mxu0 0
        %1290 = vmatprep.subr.bf16.mxu0 0
        %1291 = vmatpush2.bf16.msra.mxu0 0
        %1292 = vmatprep.subr.bf16.mxu0 0
        %1293 = vmatpush2.bf16.msra.mxu0 0
        %1294 = vmatprep.subr.bf16.mxu0 0
        %1295 = vmatpush2.bf16.msra.mxu0 0
        %1296 = vmatprep.subr.bf16.mxu0 0
        %1297 = vmatpush2.bf16.msra.mxu0 0
        %1298 = vmatprep.subr.bf16.mxu0 0
        %1299 = vmatpush2.bf16.msra.mxu0 0
        %1300 = vmatprep.mubr.bf16.mxu0 0
        %1301 = vmatmul.mubr.bf16.gmra.mxu0 %v1115
        %v1302 = vpop.f32.mrf.mxu0
        %v1303 = vadd.f32 %v1213, %v1302
        %v1304 = vpop.f32.mrf.mxu0
        %v1305 = vpop.f32.mrf.mxu0
        %v1306 = vadd.f32 %v1216, %v1305
        %v1307 = vpop.f32.mrf.mxu0
        %1308 = vdwg.mxu0
        %v1309 = vld [vmem:[#allocation4] sm:$0xe]
        %s1310 = scalar_lea.vmem [#allocation11], 128
        %v1311 = vld [vmem:[%s1310] sm:$0xf]
        %v1312 = vld [vmem:[%s1310 + $0x4] sm:$0xf]
        %v1313 = vld [vmem:[%s1310 + $0x8] sm:$0xf]
        %v1314 = vld [vmem:[%s1310 + $0xc] sm:$0xf]
        %v1315 = vld [vmem:[%s1310 + $0x10] sm:$0xf]
        %v1316 = vld [vmem:[%s1310 + $0x14] sm:$0xf]
        %v1317 = vld [vmem:[%s1310 + $0x18] sm:$0xf]
        %v1318 = vld [vmem:[%s1310 + $0x1c] sm:$0xf]
        %v1319 = vld [vmem:[%s1310 + $0x20] sm:$0xf]
        %v1320 = vld [vmem:[%s1310 + $0x24] sm:$0xf]
        %v1321 = vld [vmem:[%s1310 + $0x28] sm:$0xf]
        %v1322 = vld [vmem:[%s1310 + $0x2c] sm:$0xf]
        %v1323 = vld [vmem:[%s1310 + $0x30] sm:$0xf]
        %v1324 = vld [vmem:[%s1310 + $0x34] sm:$0xf]
        %v1325 = vld [vmem:[%s1310 + $0x38] sm:$0xf]
        %v1326 = vld [vmem:[%s1310 + $0x3c] sm:$0xf]
        %v1328 = vunpack.c.l.b16 %v1309
        %v1329 = vpack.c.b16 %v1113, %v1328
        %v1330 = vrot.slane %v1329, 1
        %v1331 = vrot.slane %v1116, 1
        %v1332 = vsel %vm884, %v1330, %v1331
        %v1350 = vunpack.c.l.b16 %v1311
        %v1351 = vunpack.c.l.b16 %v1312
        %v1352 = vunpack.c.l.b16 %v1313
        %v1353 = vunpack.c.l.b16 %v1314
        %v1354 = vunpack.c.l.b16 %v1315
        %v1355 = vunpack.c.l.b16 %v1316
        %v1356 = vunpack.c.l.b16 %v1317
        %v1357 = vunpack.c.l.b16 %v1318
        %v1358 = vunpack.c.l.b16 %v1319
        %v1359 = vunpack.c.l.b16 %v1320
        %v1360 = vunpack.c.l.b16 %v1321
        %v1361 = vunpack.c.l.b16 %v1322
        %v1362 = vunpack.c.l.b16 %v1323
        %v1363 = vunpack.c.l.b16 %v1324
        %v1364 = vunpack.c.l.b16 %v1325
        %v1365 = vunpack.c.l.b16 %v1326
        %v1366 = vpack.c.b16 %v1351, %v1350
        %v1367 = vpack.c.b16 %v1353, %v1352
        %v1368 = vpack.c.b16 %v1355, %v1354
        %v1369 = vpack.c.b16 %v1357, %v1356
        %v1370 = vpack.c.b16 %v1359, %v1358
        %v1371 = vpack.c.b16 %v1361, %v1360
        %v1372 = vpack.c.b16 %v1363, %v1362
        %v1373 = vpack.c.b16 %v1365, %v1364
        %1382 = vmatprep.subr.bf16.mxu0 0
        %1383 = vmatpush1.bf16.msra.mxu0 %v1373
        %1384 = vmatprep.subr.bf16.mxu0 0
        %1385 = vmatpush1.bf16.msra.mxu0 %v1372
        %1386 = vmatprep.subr.bf16.mxu0 0
        %1387 = vmatpush1.bf16.msra.mxu0 %v1371
        %1388 = vmatprep.subr.bf16.mxu0 0
        %1389 = vmatpush1.bf16.msra.mxu0 %v1370
        %1390 = vmatprep.subr.bf16.mxu0 0
        %1391 = vmatpush1.bf16.msra.mxu0 %v1369
        %1392 = vmatprep.subr.bf16.mxu0 0
        %1393 = vmatpush1.bf16.msra.mxu0 %v1368
        %1394 = vmatprep.subr.bf16.mxu0 0
        %1395 = vmatpush1.bf16.msra.mxu0 %v1367
        %1396 = vmatprep.subr.bf16.mxu0 0
        %1397 = vmatpush1.bf16.msra.mxu0 %v1366
        %1398 = vmatprep.subr.bf16.mxu0 0
        %1399 = vmatpush2.bf16.msra.mxu0 0
        %1400 = vmatprep.subr.bf16.mxu0 0
        %1401 = vmatpush2.bf16.msra.mxu0 0
        %1402 = vmatprep.subr.bf16.mxu0 0
        %1403 = vmatpush2.bf16.msra.mxu0 0
        %1404 = vmatprep.subr.bf16.mxu0 0
        %1405 = vmatpush2.bf16.msra.mxu0 0
        %1406 = vmatprep.subr.bf16.mxu0 0
        %1407 = vmatpush2.bf16.msra.mxu0 0
        %1408 = vmatprep.subr.bf16.mxu0 0
        %1409 = vmatpush2.bf16.msra.mxu0 0
        %1410 = vmatprep.subr.bf16.mxu0 0
        %1411 = vmatpush2.bf16.msra.mxu0 0
        %1412 = vmatprep.subr.bf16.mxu0 0
        %1413 = vmatpush2.bf16.msra.mxu0 0
        %1414 = vmatprep.mubr.bf16.mxu0 0
        %1415 = vmatmul.mubr.bf16.gmra.mxu0 %v1332
        %v1416 = vpop.f32.mrf.mxu0
        %v1417 = vadd.f32 0.0, %v1416
        %v1418 = vpop.f32.mrf.mxu0
        %v1419 = vpop.f32.mrf.mxu0
        %v1420 = vadd.f32 0.0, %v1419
        %v1421 = vpop.f32.mrf.mxu0
        %1422 = vdwg.mxu0
        %v1423 = vadd.f32 %v1303, %v1417
        %v1424 = vadd.f32 %v1306, %v1420
        %v1425 = vld [vmem:[%s7] sm:$0x1]
        %v1427 = vlaneseq
        %v1428 = vshrl.u32 %v1427, 7
        %v1429 = vsub.s32 0, %v1428
        %v1430 = vrot.slane %v1425, %v1429
        %v1432 = vadd.f32 %v1423, %v1430
        %v1433 = vadd.f32 %v1424, %v1430
        %v1434 = vmax.f32 %v1432, 0.0
        %v1435 = vmax.f32 %v1433, 0.0
        %1436 = vst [vmem:[%s379] sm:$0xff] %v1434
        %1437 = vst [vmem:[%s379 + $0x8] sm:$0xff] %v1435
        %s1438 = sand.u32 %s213, 1
        %s1439 = scalar_lea.sflag [#allocation7], %s1438
        %s1440 = sand.u32 %s213, 1
        %s1441 = smul.addr %s1440, 16
        %s1442 = scalar_lea.vmem [#allocation13], %s1441
        // Predicated region
        $region69: #{tpu_custom_call.1} parent=51 // pred_check
          %p1443 = pneg %p223
        $region70: #{tpu_custom_call.1} parent=51 // pred_check_branch
          %1445 = sbr.rel (%p1443) target = $region72
        $region71: #{tpu_custom_call.1} parent=51 // pred_region
          %s1447 = ssub.s32 256, 256
          %1448 = vsyncadd %s1439, %s1447
          %s1449 = smul.addr %s27, 2
          %s1450 = smul.addr %s1449, 128
          %s1451 = scalar_lea.hbm %s8, %s1450
          %s1452 = sshll.u32 %s1442, 4
          %s1453 = int_to_ptr.vmem [resolvable:$true] %s1452
          %1458 = dma.vmem_to_hbm [thread:$0]  %s1453, 256, %s1451, %s1439, 128, 128, 8
        $region72: #{tpu_custom_call.1} parent=51 // pred_fallthru
          _
      $region52: #{tpu_custom_call.1} parent=5 // pred_fallthru
        _
      %p1459 = scmp.le.s32.totalorder 2, %s22
      // Predicated region
      $region73: #{tpu_custom_call.1} parent=5 // pred_check
        %p1460 = pneg %p1459
      $region74: #{tpu_custom_call.1} parent=5 // pred_check_branch
        %1462 = sbr.rel (%p1460) target = $region76
      $region75: #{tpu_custom_call.1} parent=5 // pred_region
        %s1463 = ssub.s32 %s22, 2
        // Predicated region
        $region77: #{tpu_custom_call.1} parent=75 // pred_check
          %p1464 = pneg %p229
        $region78: #{tpu_custom_call.1} parent=75 // pred_check_branch
          %1466 = sbr.rel (%p1464) target = $region80
        $region79: #{tpu_custom_call.1} parent=75 // pred_region
          %s1467 = sand.u32 %s214, 1
          %s1468 = scalar_lea.sflag [#allocation7], %s1467
          %s1469 = sand.u32 %s214, 1
          %s1470 = smul.addr %s1469, 16
          %s1471 = scalar_lea.vmem [#allocation13], %s1470
          %1472 = dma.done %s1468, 256
        $region80: #{tpu_custom_call.1} parent=75 // pred_fallthru
          _
      $region76: #{tpu_custom_call.1} parent=5 // pred_fallthru
        _
    $region6: #{tpu_custom_call.1} parent=1 // loop_footer
      %s26 = sadd.s32 1, %s22
    $region7: #{tpu_custom_call.1} parent=1 // loop_footer_branch
      %21 = sbr.rel target = $region3
    $region8: #{tpu_custom_call.1} parent=1 // loop_exit
      _
    %1473 = vsyncpa [#allocation6], 1
    %s1474 = scalar_lea.sflag [#allocation6], 1
    %1475 = vsyncpa %s1474, 1
    %1476 = vsyncpa [#allocation9], 1
    %1477 = vsyncpa [#allocation12], 1
    %1478 = vsyncpa [#allocation7], 1
    %s1479 = scalar_lea.sflag [#allocation7], 1
    %1480 = vsyncpa %s1479, 1

</llo_original>
